<compile_context>
chip_gen: v7x
topology: tpu7x:2x2x1
jax: 0.10.0
libtpu: 0.0.40
codegen_flags: <defaults>
</compile_context>

<pallas_src>
import functools
import math

import jax
import jax.numpy as jnp
from jax.experimental import pallas as pl
from jax.experimental.pallas import tpu as pltpu

NEG_SLOPE = 0.01                 # nn.LeakyReLU default
HALF_LOG_2PI = 0.5 * math.log(2.0 * math.pi)


def _softclip(t, lo, hi):
    # TODO(synk): ut.softclip assumed to be lo + softplus(t-lo) - softplus(t-hi)
    return lo + jax.nn.softplus(t - lo) - jax.nn.softplus(t - hi)


def _round_up(n, m):
    return ((n + m - 1) // m) * m


@functools.lru_cache(maxsize=None)
def _tpu_vmem_capacity_bytes():
    """Trace-time hardware query; conservative (v7x-class) fallback."""
    try:
        return int(pltpu.get_tpu_info().vmem_capacity_bytes)
    except Exception:
        return 64 << 20


@functools.lru_cache(maxsize=None)
def _supports_single_buffered_constants():
    """One-time feature check: can constant-index-map inputs use pl.Buffered(1)?"""
    if not hasattr(pl, "Buffered"):
        return False

    def _k(c_ref, x_ref, o_ref):
        o_ref[...] = x_ref[...] + c_ref[...]

    try:
        fn = pl.pallas_call(
            _k,
            out_shape=jax.ShapeDtypeStruct((16, 128), jnp.float32),
            grid=(2,),
            in_specs=[
                pl.BlockSpec((8, 128), lambda i: (0, 0), pipeline_mode=pl.Buffered(1)),
                pl.BlockSpec((8, 128), lambda i: (i, 0)),
            ],
            out_specs=pl.BlockSpec((8, 128), lambda i: (i, 0)),
        )
        jax.block_until_ready(
            fn(jnp.zeros((8, 128), jnp.float32), jnp.zeros((16, 128), jnp.float32)))
        return True
    except Exception:
        return False


def _choose_tiling(batch, vmem_cap):
    """Return (tile_b, padded_batch).

    v7x-class (<=64 MiB VMEM, 2 TCs): keep >=2 tiles once batch > 128 so the
    'parallel' grid axis spans both cores and activations stay small.
    v5e/v6e (128 MiB, 1 TC): biggest tile (whole batch up to 512, else 512)."""
    b8 = _round_up(max(batch, 1), 8)
    if vmem_cap <= (64 << 20):
        tile = b8 if b8 <= 128 else 128
    else:
        tile = b8 if b8 <= 512 else 512
    return tile, _round_up(batch, tile)


def vae_kernel(
    # -------- inputs --------
    x_ref, noise_ref,
    qw1_ref, qb1_ref, qw2_ref, qb2_ref,
    qw3m_ref, qb3m_ref, qw3v_ref, qb3v_ref,
    pw1_ref, pb1_ref, pw2_ref, pb2_ref,
    pw3_ref, pb3_ref, inv2ss_ref,
    # -------- outputs --------
    mu_ref, logvar_ref, z_ref, rec_ref,
    kld_part_ref, rec_part_ref,
    *, tile_b, valid_b, masked,
):
    x = x_ref[...]                                           # (TB, nx) f32

    if masked:
        row = (jax.lax.broadcasted_iota(jnp.int32, (tile_b, 1), 0)
               + pl.program_id(0) * tile_b)
        wvalid = (row < valid_b).astype(jnp.float32)         # (TB, 1) row mask

    def hidden(h_bf16, w_ref, b_ref):
        # Linear (BatchNorm affine pre-folded into w/b) -> LeakyReLU, emitted in bf16.
        h = jnp.dot(h_bf16, w_ref[...],
                    preferred_element_type=jnp.float32) + b_ref[...]
        return jnp.maximum(h, NEG_SLOPE * h).astype(jnp.bfloat16)

    # ---- Qz encoder: 2 hidden blocks -> split plain Linear to mu / logvar ----
    h = hidden(x.astype(jnp.bfloat16), qw1_ref, qb1_ref)
    h = hidden(h, qw2_ref, qb2_ref)
    mu_z = jnp.dot(h, qw3m_ref[...], preferred_element_type=jnp.float32) + qb3m_ref[...]
    logvar_z = jnp.dot(h, qw3v_ref[...], preferred_element_type=jnp.float32) + qb3v_ref[...]
    std_z = jnp.exp(0.5 * logvar_z)
    z = mu_z + noise_ref[...] * std_z

    mu_ref[...] = mu_z
    logvar_ref[...] = logvar_z
    z_ref[...] = z

    # Per-tile partial KL: sum over valid rows of -0.5*(1 + logvar - mu^2 - exp(logvar)).
    kld = -0.5 * (1.0 + logvar_z - mu_z * mu_z - jnp.exp(logvar_z))
    kld_sum = jnp.sum(kld * wvalid) if masked else jnp.sum(kld)
    kld_part_ref[...] = jnp.full(kld_part_ref.shape, kld_sum, dtype=jnp.float32)

    # ---- Px decoder: 2 hidden blocks -> plain Linear to reconstruction ----
    g = hidden(z.astype(jnp.bfloat16), pw1_ref, pb1_ref)
    g = hidden(g, pw2_ref, pb2_ref)
    rec = jnp.dot(g, pw3_ref[...], preferred_element_type=jnp.float32) + pb3_ref[...]
    rec_ref[...] = rec

    # Per-tile partial Gaussian NLL (variable part: (x-rec)^2 / (2*sigma^2)).
    # The constant term sum(logsig) + nx*0.5*log(2*pi) is added once in the wrapper.
    diff = x - rec
    sq = diff * diff * inv2ss_ref[...]
    rec_sum = jnp.sum(sq * wvalid) if masked else jnp.sum(sq)
    rec_part_ref[...] = jnp.full(rec_part_ref.shape, rec_sum, dtype=jnp.float32)


def prepare_params(params):
    """One-time parameter preparation (do NOT redo per forward call):
       - softclip(logsigma_x) -> 1/(2*sigma^2) and the constant NLL term,
       - BatchNorm affine folded into each hidden Linear (in f32, pre-bf16-cast),
       - weights cast to bf16 for the MXU,
       - final encoder Linear split into mu / logvar halves (no in-kernel slice)."""
    nx = params["qw1"].shape[0]
    nh = params["qw1"].shape[1]
    nz = params["pw1"].shape[0]

    ls_clip = _softclip(params["logsigma_x"].reshape(1, nx).astype(jnp.float32),
                        -7.0, 7.0)
    sigma = jnp.exp(ls_clip)
    inv2ss = (0.5 / (sigma * sigma)).astype(jnp.float32)          # 1/(2*sigma^2)
    const_per_sample = jnp.sum(ls_clip) + nx * HALF_LOG_2PI       # scalar

    def fold(w, b, s, t):       # (x@W + b)*s + t == x@(W*s) + (b*s + t)
        return ((w * s).astype(jnp.bfloat16),
                (b * s + t).astype(jnp.float32))

    qw1, qb1 = fold(params["qw1"], params["qb1"], params["qs1"], params["qt1"])
    qw2, qb2 = fold(params["qw2"], params["qb2"], params["qs2"], params["qt2"])
    pw1, pb1 = fold(params["pw1"], params["pb1"], params["ps1"], params["pt1"])
    pw2, pb2 = fold(params["pw2"], params["pb2"], params["ps2"], params["pt2"])

    qw3m = params["qw3"][:, :nz].astype(jnp.bfloat16)
    qw3v = params["qw3"][:, nz:].astype(jnp.bfloat16)
    qb3m = params["qb3"][:, :nz].astype(jnp.float32)
    qb3v = params["qb3"][:, nz:].astype(jnp.float32)
    pw3 = params["pw3"].astype(jnp.bfloat16)
    pb3 = params["pb3"].astype(jnp.float32)

    kernel_params = (qw1, qb1, qw2, qb2, qw3m, qb3m, qw3v, qb3v,
                     pw1, pb1, pw2, pb2, pw3, pb3, inv2ss)
    return {"kernel_params": kernel_params,
            "const_per_sample": const_per_sample,
            "nx": nx, "nh": nh, "nz": nz}


def vae_forward(x_img, noise, prepared, *, tile_b=None):
    """Full VAE forward; returns dict mirroring the PyTorch module's output."""
    B = x_img.shape[0]
    x = x_img.reshape(B, -1).astype(jnp.float32)             # nn.Flatten()
    nx = x.shape[1]
    nz = prepared["nz"]
    nh = prepared["nh"]
    assert nx == prepared["nx"]
    assert noise.shape == (B, nz)

    vmem_cap = _tpu_vmem_capacity_bytes()
    if tile_b is None:
        tile_b, b_pad = _choose_tiling(B, vmem_cap)
    else:
        tile_b = _round_up(tile_b, 8)
        b_pad = _round_up(B, tile_b)
    num_tiles = b_pad // tile_b
    masked = (b_pad != B)

    noise = noise.astype(jnp.float32)
    if masked:
        pad = b_pad - B
        x = jnp.pad(x, ((0, pad), (0, 0)))
        noise = jnp.pad(noise, ((0, pad), (0, 0)))

    kernel_params = prepared["kernel_params"]

    # Constant params: index_map never changes -> single DMA over the whole grid;
    # single-buffer them when this jax build supports it (checked ONCE).
    single_buffer = _supports_single_buffered_constants()
    if single_buffer:
        const_spec = lambda p: pl.BlockSpec(p.shape, lambda i: (0, 0),
                                            pipeline_mode=pl.Buffered(1))
    else:
        const_spec = lambda p: pl.BlockSpec(p.shape, lambda i: (0, 0))

    batch_spec = lambda feat: pl.BlockSpec((tile_b, feat), lambda i: (i, 0))
    # lane-dense (8,128) per-tile partial-loss blocks (no masked 1-lane stores)
    part_spec = pl.BlockSpec((8, 128), lambda i: (i, 0))

    in_specs = ([batch_spec(nx), batch_spec(nz)]
                + [const_spec(p) for p in kernel_params])
    out_specs = [batch_spec(nz), batch_spec(nz), batch_spec(nz), batch_spec(nx),
                 part_spec, part_spec]
    out_shapes = [
        jax.ShapeDtypeStruct((b_pad, nz), jnp.float32),                # mu_z
        jax.ShapeDtypeStruct((b_pad, nz), jnp.float32),                # logvar_z
        jax.ShapeDtypeStruct((b_pad, nz), jnp.float32),                # z
        jax.ShapeDtypeStruct((b_pad, nx), jnp.float32),                # rec
        jax.ShapeDtypeStruct((num_tiles * 8, 128), jnp.float32),       # partial KL
        jax.ShapeDtypeStruct((num_tiles * 8, 128), jnp.float32),       # partial recNLL
    ]

    # ---- generation-aware VMEM budget ----
    nbytes = lambda a: a.size * a.dtype.itemsize
    param_bytes = sum(nbytes(p) for p in kernel_params)
    param_mult = 1 if single_buffer else 2                 # buffers actually allocated
    io_bytes = 2 * 4 * tile_b * (nx + nz)                  # x + noise (double-buffered)
    io_bytes += 2 * 4 * tile_b * (3 * nz + nx)             # mu/logvar/z/rec tiles
    io_bytes += 2 * 2 * 4 * 8 * 128                        # partial-loss tiles
    act_bytes = 8 * 4 * tile_b * max(nh, nx)               # f32 activation temporaries
    hard_cap = (48 << 20) if vmem_cap <= (64 << 20) else (96 << 20)
    vmem_limit = int(min(hard_cap,
                         max(16 << 20,
                             param_mult * param_bytes + io_bytes
                             + act_bytes + (4 << 20))))

    kernel = functools.partial(vae_kernel, tile_b=tile_b, valid_b=B, masked=masked)

    outs = pl.pallas_call(
        kernel,
        out_shape=out_shapes,
        grid=(num_tiles,),
        in_specs=in_specs,
        out_specs=out_specs,
        compiler_params=pltpu.CompilerParams(
            dimension_semantics=("parallel",),     # tiles independent -> megacore OK
            vmem_limit_bytes=vmem_limit),
    )(x, noise, *kernel_params)

    mu_z, logvar_z, z, rec, kld_part, rec_part = outs
    if masked:
        mu_z, logvar_z, z, rec = mu_z[:B], logvar_z[:B], z[:B], rec[:B]

    # combine per-tile partials into the module's scalar losses
    kld_sum = jnp.sum(kld_part.reshape(num_tiles, 8, 128)[:, 0, 0])
    rec_sum = jnp.sum(rec_part.reshape(num_tiles, 8, 128)[:, 0, 0])
    loss_z = kld_sum / B
    loss_rec = rec_sum / B + prepared["const_per_sample"]
    total = loss_rec + loss_z

    return {
        "z": z, "logvar_z": logvar_z, "mu_z": mu_z, "rec": rec,
        "losses": {"loss_z": loss_z, "rec": loss_rec, "total_loss": total},
    }


def reference_forward(x_img, noise, params, *, nz):
    """Pure-JAX reference of the same (eval-mode, bf16-matmul) forward."""
    B = x_img.shape[0]
    x = x_img.reshape(B, -1).astype(jnp.float32)

    def mm(h, w):
        return jnp.dot(h.astype(jnp.bfloat16), w.astype(jnp.bfloat16),
                       preferred_element_type=jnp.float32)

    def hidden(h, w, b, s, t):
        h = mm(h, w) + b
        h = h * s + t
        return jnp.where(h >= 0.0, h, NEG_SLOPE * h)

    h = hidden(x, params["qw1"], params["qb1"], params["qs1"], params["qt1"])
    h = hidden(h, params["qw2"], params["qb2"], params["qs2"], params["qt2"])
    tempz = mm(h, params["qw3"]) + params["qb3"]
    mu_z, logvar_z = tempz[:, :nz], tempz[:, nz:]
    std_z = jnp.exp(0.5 * logvar_z)
    z = mu_z + noise * std_z
    loss_z = jnp.mean(jnp.sum(-0.5 * (1 + logvar_z - mu_z**2 - jnp.exp(logvar_z)), -1))

    g = hidden(z, params["pw1"], params["pb1"], params["ps1"], params["pt1"])
    g = hidden(g, params["pw2"], params["pb2"], params["ps2"], params["pt2"])
    rec = mm(g, params["pw3"]) + params["pb3"]

    ls = _softclip(params["logsigma_x"], -7.0, 7.0)
    sigma = jnp.exp(ls)
    neg_logp = (x - rec) ** 2 / (2.0 * sigma ** 2) + ls + HALF_LOG_2PI
    loss_rec = jnp.mean(jnp.sum(neg_logp, -1))
    return {"mu_z": mu_z, "logvar_z": logvar_z, "z": z, "rec": rec,
            "loss_z": loss_z, "loss_rec": loss_rec, "total": loss_rec + loss_z}


def init_params(key, nx, nh, nz):
    """Deterministic synthetic parameters (shapes from the module __init__)."""
    ks = jax.random.split(key, 6)
    bn_eps = 1e-5
    # BatchNorm (eval): running_mean=0, running_var=1, gamma=1, beta=0
    bn_scale = jnp.full((1, nh), 1.0 / math.sqrt(1.0 + bn_eps), jnp.float32)
    bn_shift = jnp.zeros((1, nh), jnp.float32)

    def lin(k, din, dout):
        w = jax.random.normal(k, (din, dout), jnp.float32) * (1.0 / math.sqrt(din))
        b = jnp.zeros((1, dout), jnp.float32)
        return w, b

    qw1, qb1 = lin(ks[0], nx, nh)
    qw2, qb2 = lin(ks[1], nh, nh)
    qw3, qb3 = lin(ks[2], nh, 2 * nz)
    pw1, pb1 = lin(ks[3], nz, nh)
    pw2, pb2 = lin(ks[4], nh, nh)
    pw3, pb3 = lin(ks[5], nh, nx)
    return {
        "qw1": qw1, "qb1": qb1, "qs1": bn_scale, "qt1": bn_shift,
        "qw2": qw2, "qb2": qb2, "qs2": bn_scale, "qt2": bn_shift,
        "qw3": qw3, "qb3": qb3,
        "pw1": pw1, "pb1": pb1, "ps1": bn_scale, "pt1": bn_shift,
        "pw2": pw2, "pb2": pb2, "ps2": bn_scale, "pt2": bn_shift,
        "pw3": pw3, "pb3": pb3,
        "logsigma_x": jnp.zeros((1, nx), jnp.float32),   # torch.zeros(nx) parameter
    }


if __name__ == "__main__":
    # Small shapes consistent with the module: nx = flattened image size.
    B, C, H, W = 16, 1, 16, 16          # -> nx = 256
    NX, NH, NZ = C * H * W, 256, 128

    key = jax.random.PRNGKey(0)
    k_x, k_noise, k_p = jax.random.split(key, 3)
    x_img = jax.random.uniform(k_x, (B, C, H, W), jnp.float32)     # NCHW like PyTorch
    noise = jax.random.normal(k_noise, (B, NZ), jnp.float32)       # torch.randn_like(mu_z)
    params = init_params(k_p, NX, NH, NZ)

    prepared = prepare_params(params)        # one-time: folded BN + bf16 weights
    out = vae_forward(x_img, noise, prepared)
    jax.block_until_ready(out)

    ref = reference_forward(x_img, noise, params, nz=NZ)
    # bf16 matmul inputs in both paths; compare with bf16-appropriate tolerances.
    assert jnp.allclose(out["mu_z"], ref["mu_z"], atol=2e-2, rtol=2e-2)
    assert jnp.allclose(out["logvar_z"], ref["logvar_z"], atol=2e-2, rtol=2e-2)
    assert jnp.allclose(out["z"], ref["z"], atol=3e-2, rtol=3e-2)
    assert jnp.allclose(out["rec"], ref["rec"], atol=3e-2, rtol=3e-2)
    assert jnp.allclose(out["losses"]["loss_z"], ref["loss_z"], atol=1e-1, rtol=1e-2)
    assert jnp.allclose(out["losses"]["rec"], ref["loss_rec"], atol=2e-1, rtol=1e-2)
    assert jnp.allclose(out["losses"]["total_loss"], ref["total"], atol=2e-1, rtol=1e-2)

    # Also exercise the padded, multi-tile, masked-loss path (B not a tile multiple).
    out2 = vae_forward(x_img[:13], noise[:13], prepared, tile_b=8)
    jax.block_until_ready(out2)
    ref2 = reference_forward(x_img[:13], noise[:13], params, nz=NZ)
    assert jnp.allclose(out2["rec"], ref2["rec"], atol=3e-2, rtol=3e-2)
    assert jnp.allclose(out2["losses"]["loss_z"], ref2["loss_z"], atol=1e-1, rtol=1e-2)
    assert jnp.allclose(out2["losses"]["total_loss"], ref2["total"], atol=2e-1, rtol=1e-2)

    print("KERNEL_OK")
</pallas_src>

<mosaic_0001>
module attributes {stable_mosaic.version = 11 : i64} {
  func.func @_k(%arg0: i32, %arg1: memref<8x128xf32, #tpu.memory_space<vmem>>, %arg2: memref<8x128xf32, #tpu.memory_space<vmem>>, %arg3: memref<8x128xf32, #tpu.memory_space<vmem>>) attributes {dimension_semantics = [#tpu.dimension_semantics<arbitrary>], iteration_bounds = array<i64: 2>, scalar_prefetch = 0 : i64, scratch_operands = 0 : i64, tpu.core_type = #tpu.core_type<tc>, window_params = [{pipeline_mode = #tpu.pipeline_mode<synchronous>, transform_indices = @transform_0, window_bounds = array<i64: 8, 128>}, {transform_indices = @transform_1, window_bounds = array<i64: 8, 128>}, {transform_indices = @transform_2, window_bounds = array<i64: 8, 128>}]} {
    %c0 = arith.constant 0 : index
    %c0_0 = arith.constant 0 : index
    %0 = vector.load %arg2[%c0, %c0_0] : memref<8x128xf32, #tpu.memory_space<vmem>>, vector<8x128xf32>
    %c0_1 = arith.constant 0 : index
    %c0_2 = arith.constant 0 : index
    %1 = vector.load %arg1[%c0_1, %c0_2] : memref<8x128xf32, #tpu.memory_space<vmem>>, vector<8x128xf32>
    %2 = arith.addf %0, %1 : vector<8x128xf32>
    %c0_3 = arith.constant 0 : index
    %c0_4 = arith.constant 0 : index
    %3 = vector.load %arg3[%c0_3, %c0_4] : memref<8x128xf32, #tpu.memory_space<vmem>>, vector<8x128xf32>
    tpu.vector_store %arg3[%c0_3, %c0_4], %2 {strides = array<i32>} : memref<8x128xf32, #tpu.memory_space<vmem>>, vector<8x128xf32>,
    return
  }
  func.func @transform_0(%arg0: i32) -> (i32, i32) {
    %c0_i32 = arith.constant 0 : i32
    %c0_i32_0 = arith.constant 0 : i32
    %c0_i32_1 = arith.constant 0 : i32
    return %c0_i32, %c0_i32_0 : i32, i32
  }
  func.func @transform_1(%arg0: i32) -> (i32, i32) {
    %c0_i32 = arith.constant 0 : i32
    %c0_i32_0 = arith.constant 0 : i32
    return %arg0, %c0_i32 : i32, i32
  }
  func.func @transform_2(%arg0: i32) -> (i32, i32) {
    %c0_i32 = arith.constant 0 : i32
    %c0_i32_0 = arith.constant 0 : i32
    return %arg0, %c0_i32 : i32, i32
  }
}

module attributes {stable_mosaic.version = 11 : i64} {
  func.func @vae_kernel(%arg0: i32, %arg1: memref<16x256xf32, #tpu.memory_space<vmem>>, %arg2: memref<16x128xf32, #tpu.memory_space<vmem>>, %arg3: memref<256x256xbf16, #tpu.memory_space<vmem>>, %arg4: memref<1x256xf32, #tpu.memory_space<vmem>>, %arg5: memref<256x256xbf16, #tpu.memory_space<vmem>>, %arg6: memref<1x256xf32, #tpu.memory_space<vmem>>, %arg7: memref<256x128xbf16, #tpu.memory_space<vmem>>, %arg8: memref<1x128xf32, #tpu.memory_space<vmem>>, %arg9: memref<256x128xbf16, #tpu.memory_space<vmem>>, %arg10: memref<1x128xf32, #tpu.memory_space<vmem>>, %arg11: memref<128x256xbf16, #tpu.memory_space<vmem>>, %arg12: memref<1x256xf32, #tpu.memory_space<vmem>>, %arg13: memref<256x256xbf16, #tpu.memory_space<vmem>>, %arg14: memref<1x256xf32, #tpu.memory_space<vmem>>, %arg15: memref<256x256xbf16, #tpu.memory_space<vmem>>, %arg16: memref<1x256xf32, #tpu.memory_space<vmem>>, %arg17: memref<1x256xf32, #tpu.memory_space<vmem>>, %arg18: memref<16x128xf32, #tpu.memory_space<vmem>>, %arg19: memref<16x128xf32, #tpu.memory_space<vmem>>, %arg20: memref<16x128xf32, #tpu.memory_space<vmem>>, %arg21: memref<16x256xf32, #tpu.memory_space<vmem>>, %arg22: memref<8x128xf32, #tpu.memory_space<vmem>>, %arg23: memref<8x128xf32, #tpu.memory_space<vmem>>) attributes {dimension_semantics = [#tpu.dimension_semantics<parallel>], iteration_bounds = array<i64: 1>, scalar_prefetch = 0 : i64, scratch_operands = 0 : i64, tpu.core_type = #tpu.core_type<tc>, window_params = [{transform_indices = @transform_0, window_bounds = array<i64: 16, 256>}, {transform_indices = @transform_1, window_bounds = array<i64: 16, 128>}, {pipeline_mode = #tpu.pipeline_mode<synchronous>, transform_indices = @transform_2, window_bounds = array<i64: 256, 256>}, {pipeline_mode = #tpu.pipeline_mode<synchronous>, transform_indices = @transform_3, window_bounds = array<i64: 1, 256>}, {pipeline_mode = #tpu.pipeline_mode<synchronous>, transform_indices = @transform_4, window_bounds = array<i64: 256, 256>}, {pipeline_mode = #tpu.pipeline_mode<synchronous>, transform_indices = @transform_5, window_bounds = array<i64: 1, 256>}, {pipeline_mode = #tpu.pipeline_mode<synchronous>, transform_indices = @transform_6, window_bounds = array<i64: 256, 128>}, {pipeline_mode = #tpu.pipeline_mode<synchronous>, transform_indices = @transform_7, window_bounds = array<i64: 1, 128>}, {pipeline_mode = #tpu.pipeline_mode<synchronous>, transform_indices = @transform_8, window_bounds = array<i64: 256, 128>}, {pipeline_mode = #tpu.pipeline_mode<synchronous>, transform_indices = @transform_9, window_bounds = array<i64: 1, 128>}, {pipeline_mode = #tpu.pipeline_mode<synchronous>, transform_indices = @transform_10, window_bounds = array<i64: 128, 256>}, {pipeline_mode = #tpu.pipeline_mode<synchronous>, transform_indices = @transform_11, window_bounds = array<i64: 1, 256>}, {pipeline_mode = #tpu.pipeline_mode<synchronous>, transform_indices = @transform_12, window_bounds = array<i64: 256, 256>}, {pipeline_mode = #tpu.pipeline_mode<synchronous>, transform_indices = @transform_13, window_bounds = array<i64: 1, 256>}, {pipeline_mode = #tpu.pipeline_mode<synchronous>, transform_indices = @transform_14, window_bounds = array<i64: 256, 256>}, {pipeline_mode = #tpu.pipeline_mode<synchronous>, transform_indices = @transform_15, window_bounds = array<i64: 1, 256>}, {pipeline_mode = #tpu.pipeline_mode<synchronous>, transform_indices = @transform_16, window_bounds = array<i64: 1, 256>}, {transform_indices = @transform_17, window_bounds = array<i64: 16, 128>}, {transform_indices = @transform_18, window_bounds = array<i64: 16, 128>}, {transform_indices = @transform_19, window_bounds = array<i64: 16, 128>}, {transform_indices = @transform_20, window_bounds = array<i64: 16, 256>}, {transform_indices = @transform_21, window_bounds = array<i64: 8, 128>}, {transform_indices = @transform_22, window_bounds = array<i64: 8, 128>}]} {
    %c0 = arith.constant 0 : index
    %c0_0 = arith.constant 0 : index
    %0 = vector.load %arg1[%c0, %c0_0] : memref<16x256xf32, #tpu.memory_space<vmem>>, vector<16x256xf32>
    %1 = arith.truncf %0 : vector<16x256xf32> to vector<16x256xbf16>
    %c0_1 = arith.constant 0 : index
    %c0_2 = arith.constant 0 : index
    %2 = vector.load %arg3[%c0_1, %c0_2] : memref<256x256xbf16, #tpu.memory_space<vmem>>, vector<256x256xbf16>
    %cst = arith.constant dense<0.000000e+00> : vector<16x256xf32>
    %3 = tpu.matmul %1, %2, %cst {dimension_numbers = #tpu.dot_dimension_numbers<[1], [0], [0], [1], [0, 0, 1, 1], [], []>} : vector<16x256xbf16>, vector<256x256xbf16>, vector<16x256xf32> -> vector<16x256xf32>
    %c0_3 = arith.constant 0 : index
    %c0_4 = arith.constant 0 : index
    %4 = vector.load %arg4[%c0_3, %c0_4] : memref<1x256xf32, #tpu.memory_space<vmem>>, vector<1x256xf32>
    %5 = vector.broadcast %4 : vector<1x256xf32> to vector<16x256xf32>
    %6 = arith.addf %3, %5 : vector<16x256xf32>
    %cst_5 = arith.constant 0.00999999977 : f32
    %7 = vector.broadcast %cst_5 : f32 to vector<16x256xf32>
    %8 = arith.mulf %7, %6 : vector<16x256xf32>
    %9 = arith.maximumf %6, %8 : vector<16x256xf32>
    %10 = arith.truncf %9 : vector<16x256xf32> to vector<16x256xbf16>
    %c0_6 = arith.constant 0 : index
    %c0_7 = arith.constant 0 : index
    %11 = vector.load %arg5[%c0_6, %c0_7] : memref<256x256xbf16, #tpu.memory_space<vmem>>, vector<256x256xbf16>
    %cst_8 = arith.constant dense<0.000000e+00> : vector<16x256xf32>
    %12 = tpu.matmul %10, %11, %cst_8 {dimension_numbers = #tpu.dot_dimension_numbers<[1], [0], [0], [1], [0, 0, 1, 1], [], []>} : vector<16x256xbf16>, vector<256x256xbf16>, vector<16x256xf32> -> vector<16x256xf32>
    %c0_9 = arith.constant 0 : index
    %c0_10 = arith.constant 0 : index
    %13 = vector.load %arg6[%c0_9, %c0_10] : memref<1x256xf32, #tpu.memory_space<vmem>>, vector<1x256xf32>
    %14 = vector.broadcast %13 : vector<1x256xf32> to vector<16x256xf32>
    %15 = arith.addf %12, %14 : vector<16x256xf32>
    %cst_11 = arith.constant 0.00999999977 : f32
    %16 = vector.broadcast %cst_11 : f32 to vector<16x256xf32>
    %17 = arith.mulf %16, %15 : vector<16x256xf32>
    %18 = arith.maximumf %15, %17 : vector<16x256xf32>
    %19 = arith.truncf %18 : vector<16x256xf32> to vector<16x256xbf16>
    %c0_12 = arith.constant 0 : index
    %c0_13 = arith.constant 0 : index
    %20 = vector.load %arg7[%c0_12, %c0_13] : memref<256x128xbf16, #tpu.memory_space<vmem>>, vector<256x128xbf16>
    %cst_14 = arith.constant dense<0.000000e+00> : vector<16x128xf32>
    %21 = tpu.matmul %19, %20, %cst_14 {dimension_numbers = #tpu.dot_dimension_numbers<[1], [0], [0], [1], [0, 0, 1, 1], [], []>} : vector<16x256xbf16>, vector<256x128xbf16>, vector<16x128xf32> -> vector<16x128xf32>
    %c0_15 = arith.constant 0 : index
    %c0_16 = arith.constant 0 : index
    %22 = vector.load %arg8[%c0_15, %c0_16] : memref<1x128xf32, #tpu.memory_space<vmem>>, vector<1x128xf32>
    %23 = vector.broadcast %22 : vector<1x128xf32> to vector<16x128xf32>
    %24 = arith.addf %21, %23 : vector<16x128xf32>
    %c0_17 = arith.constant 0 : index
    %c0_18 = arith.constant 0 : index
    %25 = vector.load %arg9[%c0_17, %c0_18] : memref<256x128xbf16, #tpu.memory_space<vmem>>, vector<256x128xbf16>
    %cst_19 = arith.constant dense<0.000000e+00> : vector<16x128xf32>
    %26 = tpu.matmul %19, %25, %cst_19 {dimension_numbers = #tpu.dot_dimension_numbers<[1], [0], [0], [1], [0, 0, 1, 1], [], []>} : vector<16x256xbf16>, vector<256x128xbf16>, vector<16x128xf32> -> vector<16x128xf32>
    %c0_20 = arith.constant 0 : index
    %c0_21 = arith.constant 0 : index
    %27 = vector.load %arg10[%c0_20, %c0_21] : memref<1x128xf32, #tpu.memory_space<vmem>>, vector<1x128xf32>
    %28 = vector.broadcast %27 : vector<1x128xf32> to vector<16x128xf32>
    %29 = arith.addf %26, %28 : vector<16x128xf32>
    %cst_22 = arith.constant 5.000000e-01 : f32
    %30 = vector.broadcast %cst_22 : f32 to vector<16x128xf32>
    %31 = arith.mulf %30, %29 : vector<16x128xf32>
    %32 = math.exp %31 : vector<16x128xf32>
    %c0_23 = arith.constant 0 : index
    %c0_24 = arith.constant 0 : index
    %33 = vector.load %arg2[%c0_23, %c0_24] : memref<16x128xf32, #tpu.memory_space<vmem>>, vector<16x128xf32>
    %34 = arith.mulf %33, %32 : vector<16x128xf32>
    %35 = arith.addf %24, %34 : vector<16x128xf32>
    %c0_25 = arith.constant 0 : index
    %c0_26 = arith.constant 0 : index
    %36 = vector.load %arg18[%c0_25, %c0_26] : memref<16x128xf32, #tpu.memory_space<vmem>>, vector<16x128xf32>
    tpu.vector_store %arg18[%c0_25, %c0_26], %24 {strides = array<i32>} : memref<16x128xf32, #tpu.memory_space<vmem>>, vector<16x128xf32>,
    %c0_27 = arith.constant 0 : index
    %c0_28 = arith.constant 0 : index
    %37 = vector.load %arg19[%c0_27, %c0_28] : memref<16x128xf32, #tpu.memory_space<vmem>>, vector<16x128xf32>
    tpu.vector_store %arg19[%c0_27, %c0_28], %29 {strides = array<i32>} : memref<16x128xf32, #tpu.memory_space<vmem>>, vector<16x128xf32>,
    %c0_29 = arith.constant 0 : index
    %c0_30 = arith.constant 0 : index
    %38 = vector.load %arg20[%c0_29, %c0_30] : memref<16x128xf32, #tpu.memory_space<vmem>>, vector<16x128xf32>
    tpu.vector_store %arg20[%c0_29, %c0_30], %35 {strides = array<i32>} : memref<16x128xf32, #tpu.memory_space<vmem>>, vector<16x128xf32>,
    %cst_31 = arith.constant 1.000000e+00 : f32
    %39 = vector.broadcast %cst_31 : f32 to vector<16x128xf32>
    %40 = arith.addf %39, %29 : vector<16x128xf32>
    %41 = arith.mulf %24, %24 : vector<16x128xf32>
    %42 = arith.subf %40, %41 : vector<16x128xf32>
    %43 = math.exp %29 : vector<16x128xf32>
    %44 = arith.subf %42, %43 : vector<16x128xf32>
    %cst_32 = arith.constant -5.000000e-01 : f32
    %45 = vector.broadcast %cst_32 : f32 to vector<16x128xf32>
    %46 = arith.mulf %45, %44 : vector<16x128xf32>
    %47 = vector.shape_cast %46 : vector<16x128xf32> to vector<1x16x128xf32>
    %cst_33 = arith.constant dense<0.000000e+00> : vector<1xf32>
    %48 = vector.multi_reduction <add>, %47, %cst_33 [1, 2] : vector<1x16x128xf32> to vector<1xf32>
    %49 = vector.shape_cast %48 : vector<1xf32> to vector<1x1x1xf32>
    %50 = vector.extract %49[0, 0, 0] : f32 from vector<1x1x1xf32>
    %51 = vector.broadcast %50 : f32 to vector<8x128xf32>
    %c0_34 = arith.constant 0 : index
    %c0_35 = arith.constant 0 : index
    %52 = vector.load %arg22[%c0_34, %c0_35] : memref<8x128xf32, #tpu.memory_space<vmem>>, vector<8x128xf32>
    tpu.vector_store %arg22[%c0_34, %c0_35], %51 {strides = array<i32>} : memref<8x128xf32, #tpu.memory_space<vmem>>, vector<8x128xf32>,
    %53 = arith.truncf %35 : vector<16x128xf32> to vector<16x128xbf16>
    %c0_36 = arith.constant 0 : index
    %c0_37 = arith.constant 0 : index
    %54 = vector.load %arg11[%c0_36, %c0_37] : memref<128x256xbf16, #tpu.memory_space<vmem>>, vector<128x256xbf16>
    %cst_38 = arith.constant dense<0.000000e+00> : vector<16x256xf32>
    %55 = tpu.matmul %53, %54, %cst_38 {dimension_numbers = #tpu.dot_dimension_numbers<[1], [0], [0], [1], [0, 0, 1, 1], [], []>} : vector<16x128xbf16>, vector<128x256xbf16>, vector<16x256xf32> -> vector<16x256xf32>
    %c0_39 = arith.constant 0 : index
    %c0_40 = arith.constant 0 : index
    %56 = vector.load %arg12[%c0_39, %c0_40] : memref<1x256xf32, #tpu.memory_space<vmem>>, vector<1x256xf32>
    %57 = vector.broadcast %56 : vector<1x256xf32> to vector<16x256xf32>
    %58 = arith.addf %55, %57 : vector<16x256xf32>
    %cst_41 = arith.constant 0.00999999977 : f32
    %59 = vector.broadcast %cst_41 : f32 to vector<16x256xf32>
    %60 = arith.mulf %59, %58 : vector<16x256xf32>
    %61 = arith.maximumf %58, %60 : vector<16x256xf32>
    %62 = arith.truncf %61 : vector<16x256xf32> to vector<16x256xbf16>
    %c0_42 = arith.constant 0 : index
    %c0_43 = arith.constant 0 : index
    %63 = vector.load %arg13[%c0_42, %c0_43] : memref<256x256xbf16, #tpu.memory_space<vmem>>, vector<256x256xbf16>
    %cst_44 = arith.constant dense<0.000000e+00> : vector<16x256xf32>
    %64 = tpu.matmul %62, %63, %cst_44 {dimension_numbers = #tpu.dot_dimension_numbers<[1], [0], [0], [1], [0, 0, 1, 1], [], []>} : vector<16x256xbf16>, vector<256x256xbf16>, vector<16x256xf32> -> vector<16x256xf32>
    %c0_45 = arith.constant 0 : index
    %c0_46 = arith.constant 0 : index
    %65 = vector.load %arg14[%c0_45, %c0_46] : memref<1x256xf32, #tpu.memory_space<vmem>>, vector<1x256xf32>
    %66 = vector.broadcast %65 : vector<1x256xf32> to vector<16x256xf32>
    %67 = arith.addf %64, %66 : vector<16x256xf32>
    %cst_47 = arith.constant 0.00999999977 : f32
    %68 = vector.broadcast %cst_47 : f32 to vector<16x256xf32>
    %69 = arith.mulf %68, %67 : vector<16x256xf32>
    %70 = arith.maximumf %67, %69 : vector<16x256xf32>
    %71 = arith.truncf %70 : vector<16x256xf32> to vector<16x256xbf16>
    %c0_48 = arith.constant 0 : index
    %c0_49 = arith.constant 0 : index
    %72 = vector.load %arg15[%c0_48, %c0_49] : memref<256x256xbf16, #tpu.memory_space<vmem>>, vector<256x256xbf16>
    %cst_50 = arith.constant dense<0.000000e+00> : vector<16x256xf32>
    %73 = tpu.matmul %71, %72, %cst_50 {dimension_numbers = #tpu.dot_dimension_numbers<[1], [0], [0], [1], [0, 0, 1, 1], [], []>} : vector<16x256xbf16>, vector<256x256xbf16>, vector<16x256xf32> -> vector<16x256xf32>
    %c0_51 = arith.constant 0 : index
    %c0_52 = arith.constant 0 : index
    %74 = vector.load %arg16[%c0_51, %c0_52] : memref<1x256xf32, #tpu.memory_space<vmem>>, vector<1x256xf32>
    %75 = vector.broadcast %74 : vector<1x256xf32> to vector<16x256xf32>
    %76 = arith.addf %73, %75 : vector<16x256xf32>
    %c0_53 = arith.constant 0 : index
    %c0_54 = arith.constant 0 : index
    %77 = vector.load %arg21[%c0_53, %c0_54] : memref<16x256xf32, #tpu.memory_space<vmem>>, vector<16x256xf32>
    tpu.vector_store %arg21[%c0_53, %c0_54], %76 {strides = array<i32>} : memref<16x256xf32, #tpu.memory_space<vmem>>, vector<16x256xf32>,
    %78 = arith.subf %0, %76 : vector<16x256xf32>
    %79 = arith.mulf %78, %78 : vector<16x256xf32>
    %c0_55 = arith.constant 0 : index
    %c0_56 = arith.constant 0 : index
    %80 = vector.load %arg17[%c0_55, %c0_56] : memref<1x256xf32, #tpu.memory_space<vmem>>, vector<1x256xf32>
    %81 = vector.broadcast %80 : vector<1x256xf32> to vector<16x256xf32>
    %82 = arith.mulf %79, %81 : vector<16x256xf32>
    %83 = vector.shape_cast %82 : vector<16x256xf32> to vector<1x16x256xf32>
    %cst_57 = arith.constant dense<0.000000e+00> : vector<1xf32>
    %84 = vector.multi_reduction <add>, %83, %cst_57 [1, 2] : vector<1x16x256xf32> to vector<1xf32>
    %85 = vector.shape_cast %84 : vector<1xf32> to vector<1x1x1xf32>
    %86 = vector.extract %85[0, 0, 0] : f32 from vector<1x1x1xf32>
    %87 = vector.broadcast %86 : f32 to vector<8x128xf32>
    %c0_58 = arith.constant 0 : index
    %c0_59 = arith.constant 0 : index
    %88 = vector.load %arg23[%c0_58, %c0_59] : memref<8x128xf32, #tpu.memory_space<vmem>>, vector<8x128xf32>
    tpu.vector_store %arg23[%c0_58, %c0_59], %87 {strides = array<i32>} : memref<8x128xf32, #tpu.memory_space<vmem>>, vector<8x128xf32>,
    return
  }
  func.func @transform_0(%arg0: i32) -> (i32, i32) {
    %c0_i32 = arith.constant 0 : i32
    %c0_i32_0 = arith.constant 0 : i32
    return %arg0, %c0_i32 : i32, i32
  }
  func.func @transform_1(%arg0: i32) -> (i32, i32) {
    %c0_i32 = arith.constant 0 : i32
    %c0_i32_0 = arith.constant 0 : i32
    return %arg0, %c0_i32 : i32, i32
  }
  func.func @transform_2(%arg0: i32) -> (i32, i32) {
    %c0_i32 = arith.constant 0 : i32
    %c0_i32_0 = arith.constant 0 : i32
    %c0_i32_1 = arith.constant 0 : i32
    return %c0_i32, %c0_i32_0 : i32, i32
  }
  func.func @transform_3(%arg0: i32) -> (i32, i32) {
    %c0_i32 = arith.constant 0 : i32
    %c0_i32_0 = arith.constant 0 : i32
    %c0_i32_1 = arith.constant 0 : i32
    return %c0_i32, %c0_i32_0 : i32, i32
  }
  func.func @transform_4(%arg0: i32) -> (i32, i32) {
    %c0_i32 = arith.constant 0 : i32
    %c0_i32_0 = arith.constant 0 : i32
    %c0_i32_1 = arith.constant 0 : i32
    return %c0_i32, %c0_i32_0 : i32, i32
  }
  func.func @transform_5(%arg0: i32) -> (i32, i32) {
    %c0_i32 = arith.constant 0 : i32
    %c0_i32_0 = arith.constant 0 : i32
    %c0_i32_1 = arith.constant 0 : i32
    return %c0_i32, %c0_i32_0 : i32, i32
  }
  func.func @transform_6(%arg0: i32) -> (i32, i32) {
    %c0_i32 = arith.constant 0 : i32
    %c0_i32_0 = arith.constant 0 : i32
    %c0_i32_1 = arith.constant 0 : i32
    return %c0_i32, %c0_i32_0 : i32, i32
  }
  func.func @transform_7(%arg0: i32) -> (i32, i32) {
    %c0_i32 = arith.constant 0 : i32
    %c0_i32_0 = arith.constant 0 : i32
    %c0_i32_1 = arith.constant 0 : i32
    return %c0_i32, %c0_i32_0 : i32, i32
  }
  func.func @transform_8(%arg0: i32) -> (i32, i32) {
    %c0_i32 = arith.constant 0 : i32
    %c0_i32_0 = arith.constant 0 : i32
    %c0_i32_1 = arith.constant 0 : i32
    return %c0_i32, %c0_i32_0 : i32, i32
  }
  func.func @transform_9(%arg0: i32) -> (i32, i32) {
    %c0_i32 = arith.constant 0 : i32
    %c0_i32_0 = arith.constant 0 : i32
    %c0_i32_1 = arith.constant 0 : i32
    return %c0_i32, %c0_i32_0 : i32, i32
  }
  func.func @transform_10(%arg0: i32) -> (i32, i32) {
    %c0_i32 = arith.constant 0 : i32
    %c0_i32_0 = arith.constant 0 : i32
    %c0_i32_1 = arith.constant 0 : i32
    return %c0_i32, %c0_i32_0 : i32, i32
  }
  func.func @transform_11(%arg0: i32) -> (i32, i32) {
    %c0_i32 = arith.constant 0 : i32
    %c0_i32_0 = arith.constant 0 : i32
    %c0_i32_1 = arith.constant 0 : i32
    return %c0_i32, %c0_i32_0 : i32, i32
  }
  func.func @transform_12(%arg0: i32) -> (i32, i32) {
    %c0_i32 = arith.constant 0 : i32
    %c0_i32_0 = arith.constant 0 : i32
    %c0_i32_1 = arith.constant 0 : i32
    return %c0_i32, %c0_i32_0 : i32, i32
  }
  func.func @transform_13(%arg0: i32) -> (i32, i32) {
    %c0_i32 = arith.constant 0 : i32
    %c0_i32_0 = arith.constant 0 : i32
    %c0_i32_1 = arith.constant 0 : i32
    return %c0_i32, %c0_i32_0 : i32, i32
  }
  func.func @transform_14(%arg0: i32) -> (i32, i32) {
    %c0_i32 = arith.constant 0 : i32
    %c0_i32_0 = arith.constant 0 : i32
    %c0_i32_1 = arith.constant 0 : i32
    return %c0_i32, %c0_i32_0 : i32, i32
  }
  func.func @transform_15(%arg0: i32) -> (i32, i32) {
    %c0_i32 = arith.constant 0 : i32
    %c0_i32_0 = arith.constant 0 : i32
    %c0_i32_1 = arith.constant 0 : i32
    return %c0_i32, %c0_i32_0 : i32, i32
  }
  func.func @transform_16(%arg0: i32) -> (i32, i32) {
    %c0_i32 = arith.constant 0 : i32
    %c0_i32_0 = arith.constant 0 : i32
    %c0_i32_1 = arith.constant 0 : i32
    return %c0_i32, %c0_i32_0 : i32, i32
  }
  func.func @transform_17(%arg0: i32) -> (i32, i32) {
    %c0_i32 = arith.constant 0 : i32
    %c0_i32_0 = arith.constant 0 : i32
    return %arg0, %c0_i32 : i32, i32
  }
  func.func @transform_18(%arg0: i32) -> (i32, i32) {
    %c0_i32 = arith.constant 0 : i32
    %c0_i32_0 = arith.constant 0 : i32
    return %arg0, %c0_i32 : i32, i32
  }
  func.func @transform_19(%arg0: i32) -> (i32, i32) {
    %c0_i32 = arith.constant 0 : i32
    %c0_i32_0 = arith.constant 0 : i32
    return %arg0, %c0_i32 : i32, i32
  }
  func.func @transform_20(%arg0: i32) -> (i32, i32) {
    %c0_i32 = arith.constant 0 : i32
    %c0_i32_0 = arith.constant 0 : i32
    return %arg0, %c0_i32 : i32, i32
  }
  func.func @transform_21(%arg0: i32) -> (i32, i32) {
    %c0_i32 = arith.constant 0 : i32
    %c0_i32_0 = arith.constant 0 : i32
    return %arg0, %c0_i32 : i32, i32
  }
  func.func @transform_22(%arg0: i32) -> (i32, i32) {
    %c0_i32 = arith.constant 0 : i32
    %c0_i32_0 = arith.constant 0 : i32
    return %arg0, %c0_i32 : i32, i32
  }
}

</mosaic_0001>

<llo_original>
// kernel: tpu_custom_call.1
$region0: #{tpu_custom_call.1}
  #allocation0 [shape = 'u32[]', space=smem, size = 0x4, offset = 0x4, fixed_abs, tag = 'smem constant byte address 0x4 - core index']
  #allocation1 [shape = 'u32[144,128]{1,0:T(1,128)}', space=vmem, size = 0x12000, scoped, tag = 'internal scratch']
  %s0 = inlined_call_operand.hbm [shape: f32[8,128], index: 0, kind: input, shape index: {}]
  %s1 = inlined_call_operand.hbm [shape: f32[16,128], index: 1, kind: input, shape index: {}]
  %s2 = inlined_call_operand.hbm [shape: f32[16,128], index: 2, kind: output, shape index: {}]
  %s3 = sld [smem:[#allocation0]]
  $region49: #{tpu_custom_call.1} parent=0
    _
  %s5 = ssub.s32 1, %s3
  %s6 = scalar_select 0, %s5, %s3
  $region1: #{tpu_custom_call.1} parent=0
    #allocation2 [shape = 'u8[4096]{0}', space=vmem, size = 0x1000, scoped, tag = 'input window, operand 0, single buffered']
    #allocation3 [shape = 's32[2]{0}', space=sflag, size = 0x8, scoped, tag = 'scoped memory for tpu_custom_call.1']
    #allocation4 [shape = 's32[2]{0}', space=sflag, size = 0x8, scoped, tag = 'scoped memory for tpu_custom_call.1']
    #allocation5 [shape = 'u8[8192]{0}', space=vmem, size = 0x2000, scoped, tag = 'input window, operand 1']
    #allocation6 [shape = 's32[2]{0}', space=sflag, size = 0x8, scoped, tag = 'scoped memory for tpu_custom_call.1']
    #allocation7 [shape = 'u8[8192]{0}', space=vmem, size = 0x2000, scoped, tag = 'output window, operand 0']
    %7 = vsyncpa [#allocation3], 0
    %8 = vsyncpa [#allocation6], 0
    %s9 = scalar_lea.sflag [#allocation6], 1
    %10 = vsyncpa %s9, 0
    %11 = vsyncpa [#allocation4], 0
    %s12 = scalar_lea.sflag [#allocation4], 1
    %13 = vsyncpa %s12, 0
    loop: start=0, step=1, limit=4
    $region2: #{tpu_custom_call.1} parent=1 // loop_pre_header
      _
    $region3: #{tpu_custom_call.1} parent=1 // loop_header
      %s15 = sphi 0, %s19
      %p16 = scmp.ge.s32.totalorder %s15, 4
      %s23 = sphi 0, %s23
      %s25 = sphi 0, %s23
      %s26 = sphi 0, %s25
      %s40 = sphi 0, %s26
      %s46 = sphi 0, %s48
      %s49 = sphi 0, %s46
      %s50 = sphi 0, %s49
      %s66 = sphi 0, %s50
      %s72 = sphi 0, %s74
      %s75 = sphi 0, %s72
      %s76 = sphi 0, %s75
      %s92 = sphi 0, %s76
    $region4: #{tpu_custom_call.1} parent=1 // loop_header_branch
      %18 = sbr.rel (%p16) target = $region8
    $region5: #{tpu_custom_call.1} parent=1 // loop_body
      %s20 = ssub.s32 %s15, 1
      %s21 = ssub.s32 %s15, 2
      %s22 = sadd.s32 %s15, 1
      %s24 = sadd.s32 %s23, 1
      %p27 = scmp.eq.s32.totalorder %s15, 1
      %p28 = scmp.ne.s32.totalorder %s23, %s25
      %p29 = scmp.eq.s32.totalorder %s15, 0
      %p30 = por %p28, %p29
      %p31 = scmp.ne.s32.totalorder %s23, %s25
      %p32 = scmp.eq.s32.totalorder %s20, 1
      %p33 = por %p31, %p32
      %p34 = scmp.ne.s32.totalorder %s25, %s26
      %p35 = scmp.eq.s32.totalorder %s20, 0
      %p36 = por %p34, %p35
      %p37 = scmp.ne.s32.totalorder %s25, %s26
      %p38 = scmp.eq.s32.totalorder %s21, 1
      %p39 = por %p37, %p38
      %p41 = scmp.ne.s32.totalorder %s26, %s40
      %p42 = scmp.eq.s32.totalorder %s21, 0
      %p43 = por %p41, %p42
      %s44 = ssub.s32 %s15, %s22
      %p45 = scmp.eq.s32.totalorder %s44, 0
      %s47 = sadd.s32 %s46, 1
      %s48 = scalar_select %p45, %s46, %s47
      %p51 = pneg %p45
      %p52 = scmp.eq.s32.totalorder %s15, 1
      %p53 = por %p51, %p52
      %p54 = scmp.ne.s32.totalorder %s46, %s49
      %p55 = scmp.eq.s32.totalorder %s15, 0
      %p56 = por %p54, %p55
      %p57 = scmp.ne.s32.totalorder %s46, %s49
      %p58 = scmp.eq.s32.totalorder %s20, 1
      %p59 = por %p57, %p58
      %p60 = scmp.ne.s32.totalorder %s49, %s50
      %p61 = scmp.eq.s32.totalorder %s20, 0
      %p62 = por %p60, %p61
      %p63 = scmp.ne.s32.totalorder %s49, %s50
      %p64 = scmp.eq.s32.totalorder %s21, 1
      %p65 = por %p63, %p64
      %p67 = scmp.ne.s32.totalorder %s50, %s66
      %p68 = scmp.eq.s32.totalorder %s21, 0
      %p69 = por %p67, %p68
      %s70 = ssub.s32 %s15, %s22
      %p71 = scmp.eq.s32.totalorder %s70, 0
      %s73 = sadd.s32 %s72, 1
      %s74 = scalar_select %p71, %s72, %s73
      %p77 = pneg %p71
      %p78 = scmp.eq.s32.totalorder %s15, 1
      %p79 = por %p77, %p78
      %p80 = scmp.ne.s32.totalorder %s72, %s75
      %p81 = scmp.eq.s32.totalorder %s15, 0
      %p82 = por %p80, %p81
      %p83 = scmp.ne.s32.totalorder %s72, %s75
      %p84 = scmp.eq.s32.totalorder %s20, 1
      %p85 = por %p83, %p84
      %p86 = scmp.ne.s32.totalorder %s75, %s76
      %p87 = scmp.eq.s32.totalorder %s20, 0
      %p88 = por %p86, %p87
      %p89 = scmp.ne.s32.totalorder %s75, %s76
      %p90 = scmp.eq.s32.totalorder %s21, 1
      %p91 = por %p89, %p90
      %p93 = scmp.ne.s32.totalorder %s76, %s92
      %p94 = scmp.eq.s32.totalorder %s21, 0
      %p95 = por %p93, %p94
      %p96 = scmp.le.s32.totalorder 1, %s15
      %p97 = scmp.lt.s32.totalorder %s15, 3
      %p98 = pnand %p96, %p97
      %p99 = pneg %p98
      // Predicated region
      $region9: #{tpu_custom_call.1} parent=5 // pred_check
        _
      $region10: #{tpu_custom_call.1} parent=5 // pred_check_branch
        %101 = sbr.rel (%p98) target = $region12
      $region11: #{tpu_custom_call.1} parent=5 // pred_region
        %s102 = ssub.s32 %s15, 1
        // Predicated region
        $region13: #{tpu_custom_call.1} parent=11 // pred_check
          %p103 = pneg %p36
        $region14: #{tpu_custom_call.1} parent=11 // pred_check_branch
          %105 = sbr.rel (%p103) target = $region16
        $region15: #{tpu_custom_call.1} parent=11 // pred_region
          %s107 = ssub.s32 128, 128
          %108 = vsyncadd [#allocation3], %s107
          %s110 = sshll.u32 [#allocation2], 4
          %s111 = int_to_ptr.vmem [resolvable:$true] %s110
          %113 = dma.hbm_to_vmem [thread:$0]  %s0, 128, %s111, [#allocation3]
        $region16: #{tpu_custom_call.1} parent=11 // pred_fallthru
          _
      $region12: #{tpu_custom_call.1} parent=5 // pred_fallthru
        _
      %p114 = scmp.lt.s32.totalorder %s15, 2
      // Predicated region
      $region17: #{tpu_custom_call.1} parent=5 // pred_check
        %p115 = pneg %p114
      $region18: #{tpu_custom_call.1} parent=5 // pred_check_branch
        %117 = sbr.rel (%p115) target = $region20
      $region19: #{tpu_custom_call.1} parent=5 // pred_region
        // Predicated region
        $region21: #{tpu_custom_call.1} parent=19 // pred_check
          %p118 = pneg %p56
        $region22: #{tpu_custom_call.1} parent=19 // pred_check_branch
          %120 = sbr.rel (%p118) target = $region24
        $region23: #{tpu_custom_call.1} parent=19 // pred_region
          %s121 = sand.u32 %s46, 1
          %s122 = scalar_lea.sflag [#allocation6], %s121
          %s123 = sand.u32 %s46, 1
          %s124 = smul.addr %s123, 8
          %s125 = scalar_lea.vmem [#allocation5], %s124
          %s127 = ssub.s32 128, 128
          %128 = vsyncadd %s122, %s127
          %s129 = smul.addr %s15, 128
          %s130 = scalar_lea.hbm %s1, %s129
          %s132 = sshll.u32 %s125, 4
          %s133 = int_to_ptr.vmem [resolvable:$true] %s132
          %135 = dma.hbm_to_vmem [thread:$0]  %s130, 128, %s133, %s122
        $region24: #{tpu_custom_call.1} parent=19 // pred_fallthru
          _
      $region20: #{tpu_custom_call.1} parent=5 // pred_fallthru
        _
      %p136 = scmp.le.s32.totalorder 1, %s15
      %p137 = scmp.lt.s32.totalorder %s15, 3
      %p138 = pnand %p136, %p137
      %p139 = pneg %p138
      // Predicated region
      $region25: #{tpu_custom_call.1} parent=5 // pred_check
        _
      $region26: #{tpu_custom_call.1} parent=5 // pred_check_branch
        %141 = sbr.rel (%p138) target = $region28
      $region27: #{tpu_custom_call.1} parent=5 // pred_region
        %s142 = ssub.s32 %s15, 1
        // Predicated region
        $region29: #{tpu_custom_call.1} parent=27 // pred_check
          %p143 = pneg %p36
        $region30: #{tpu_custom_call.1} parent=27 // pred_check_branch
          %145 = sbr.rel (%p143) target = $region32
        $region31: #{tpu_custom_call.1} parent=27 // pred_region
          %146 = dma.done [#allocation3], 128
        $region32: #{tpu_custom_call.1} parent=27 // pred_fallthru
          _
        %s147 = sand.u32 %s49, 1
        %s148 = scalar_lea.sflag [#allocation6], %s147
        %s149 = sand.u32 %s49, 1
        %s150 = smul.addr %s149, 8
        %s151 = scalar_lea.vmem [#allocation5], %s150
        // Predicated region
        $region33: #{tpu_custom_call.1} parent=27 // pred_check
          %p152 = pneg %p62
        $region34: #{tpu_custom_call.1} parent=27 // pred_check_branch
          %154 = sbr.rel (%p152) target = $region36
        $region35: #{tpu_custom_call.1} parent=27 // pred_region
          %155 = dma.done %s148, 128
        $region36: #{tpu_custom_call.1} parent=27 // pred_fallthru
          _
        %p156 = pneg %p36
        %p157 = pneg %p33
        %s158 = sand.u32 %s49, 1
        %s159 = scalar_lea.sflag [#allocation6], %s158
        %s160 = sand.u32 %s49, 1
        %s161 = smul.addr %s160, 8
        %s162 = scalar_lea.vmem [#allocation5], %s161
        %p163 = pneg %p62
        %p164 = pneg %p59
        %p165 = pneg %p88
        %p166 = pneg %p85
        %s167 = sand.u32 %s75, 1
        %s168 = scalar_lea.sflag [#allocation4], %s167
        %s169 = sand.u32 %s75, 1
        %s170 = smul.addr %s169, 8
        %s171 = scalar_lea.vmem [#allocation7], %s170
        %v172 = vld [vmem:[%s151] sm:$0xff]
        %v173 = vld [vmem:[#allocation2] sm:$0xff]
        %v174 = vadd.f32 %v172, %v173
        %175 = vst [vmem:[%s171] sm:$0xff] %v174
        %s176 = sand.u32 %s75, 1
        %s177 = scalar_lea.sflag [#allocation4], %s176
        %s178 = sand.u32 %s75, 1
        %s179 = smul.addr %s178, 8
        %s180 = scalar_lea.vmem [#allocation7], %s179
        // Predicated region
        $region37: #{tpu_custom_call.1} parent=27 // pred_check
          %p181 = pneg %p85
        $region38: #{tpu_custom_call.1} parent=27 // pred_check_branch
          %183 = sbr.rel (%p181) target = $region40
        $region39: #{tpu_custom_call.1} parent=27 // pred_region
          %s185 = ssub.s32 128, 128
          %186 = vsyncadd %s177, %s185
          %s187 = smul.addr %s20, 128
          %s188 = scalar_lea.hbm %s2, %s187
          %s190 = sshll.u32 %s180, 4
          %s191 = int_to_ptr.vmem [resolvable:$true] %s190
          %193 = dma.vmem_to_hbm [thread:$0]  %s191, 128, %s188, %s177
        $region40: #{tpu_custom_call.1} parent=27 // pred_fallthru
          _
      $region28: #{tpu_custom_call.1} parent=5 // pred_fallthru
        _
      %p194 = scmp.le.s32.totalorder 2, %s15
      // Predicated region
      $region41: #{tpu_custom_call.1} parent=5 // pred_check
        %p195 = pneg %p194
      $region42: #{tpu_custom_call.1} parent=5 // pred_check_branch
        %197 = sbr.rel (%p195) target = $region44
      $region43: #{tpu_custom_call.1} parent=5 // pred_region
        %s198 = ssub.s32 %s15, 2
        // Predicated region
        $region45: #{tpu_custom_call.1} parent=43 // pred_check
          %p199 = pneg %p91
        $region46: #{tpu_custom_call.1} parent=43 // pred_check_branch
          %201 = sbr.rel (%p199) target = $region48
        $region47: #{tpu_custom_call.1} parent=43 // pred_region
          %s202 = sand.u32 %s76, 1
          %s203 = scalar_lea.sflag [#allocation4], %s202
          %s204 = sand.u32 %s76, 1
          %s205 = smul.addr %s204, 8
          %s206 = scalar_lea.vmem [#allocation7], %s205
          %207 = dma.done %s203, 128
        $region48: #{tpu_custom_call.1} parent=43 // pred_fallthru
          _
      $region44: #{tpu_custom_call.1} parent=5 // pred_fallthru
        _
    $region6: #{tpu_custom_call.1} parent=1 // loop_footer
      %s19 = sadd.s32 1, %s15
    $region7: #{tpu_custom_call.1} parent=1 // loop_footer_branch
      %14 = sbr.rel target = $region3
    $region8: #{tpu_custom_call.1} parent=1 // loop_exit
      _
    %208 = vsyncpa [#allocation3], 1
    %s209 = scalar_lea.sflag [#allocation3], 1
    %210 = vsyncpa %s209, 1
    %211 = vsyncpa [#allocation6], 1
    %s212 = scalar_lea.sflag [#allocation6], 1
    %213 = vsyncpa %s212, 1
    %214 = vsyncpa [#allocation4], 1
    %s215 = scalar_lea.sflag [#allocation4], 1
    %216 = vsyncpa %s215, 1

// kernel: tpu_custom_call.1
$region0: #{tpu_custom_call.1}
  #allocation0 [shape = 'u32[]', space=smem, size = 0x4, offset = 0x4, fixed_abs, tag = 'smem constant byte address 0x4 - core index']
  #allocation1 [shape = 'u32[144,128]{1,0:T(1,128)}', space=vmem, size = 0x12000, scoped, tag = 'internal scratch']
  %s0 = inlined_call_operand.hbm [shape: f32[16,256], index: 0, kind: input, shape index: {}]
  %s1 = inlined_call_operand.hbm [shape: f32[16,128], index: 1, kind: input, shape index: {}]
  %s2 = inlined_call_operand.hbm [shape: bf16[256,256], index: 2, kind: input, shape index: {}]
  %s3 = inlined_call_operand.vmem [shape: f32[1,256], index: 3, kind: input, shape index: {}]
  %s4 = inlined_call_operand.hbm [shape: bf16[256,256], index: 4, kind: input, shape index: {}]
  %s5 = inlined_call_operand.vmem [shape: f32[1,256], index: 5, kind: input, shape index: {}]
  %s6 = inlined_call_operand.hbm [shape: bf16[256,128], index: 6, kind: input, shape index: {}]
  %s7 = inlined_call_operand.vmem [shape: f32[1,128], index: 7, kind: input, shape index: {}]
  %s8 = inlined_call_operand.hbm [shape: bf16[256,128], index: 8, kind: input, shape index: {}]
  %s9 = inlined_call_operand.vmem [shape: f32[1,128], index: 9, kind: input, shape index: {}]
  %s10 = inlined_call_operand.hbm [shape: bf16[128,256], index: 10, kind: input, shape index: {}]
  %s11 = inlined_call_operand.vmem [shape: f32[1,256], index: 11, kind: input, shape index: {}]
  %s12 = inlined_call_operand.hbm [shape: bf16[256,256], index: 12, kind: input, shape index: {}]
  %s13 = inlined_call_operand.vmem [shape: f32[1,256], index: 13, kind: input, shape index: {}]
  %s14 = inlined_call_operand.hbm [shape: bf16[256,256], index: 14, kind: input, shape index: {}]
  %s15 = inlined_call_operand.vmem [shape: f32[1,256], index: 15, kind: input, shape index: {}]
  %s16 = inlined_call_operand.vmem [shape: f32[1,256], index: 16, kind: input, shape index: {}]
  %s17 = inlined_call_operand.hbm [shape: f32[16,128], index: 17, kind: output, shape index: {0}]
  %s18 = inlined_call_operand.hbm [shape: f32[16,128], index: 18, kind: output, shape index: {1}]
  %s19 = inlined_call_operand.hbm [shape: f32[16,128], index: 19, kind: output, shape index: {2}]
  %s20 = inlined_call_operand.hbm [shape: f32[16,256], index: 20, kind: output, shape index: {3}]
  %s21 = inlined_call_operand.hbm [shape: f32[8,128], index: 21, kind: output, shape index: {4}]
  %s22 = inlined_call_operand.hbm [shape: f32[8,128], index: 22, kind: output, shape index: {5}]
  %23 = xla_tuple %s17, %s18, %s19, %s20, %s21, %s22
  %s24 = sld [smem:[#allocation0]]
  $region154: #{tpu_custom_call.1} parent=0
    _
  %s26 = ssub.s32 1, %s24
  %s27 = scalar_select 0, %s26, %s24
  $region1: #{tpu_custom_call.1} parent=0
    #allocation2 [shape = 'u8[16384]{0}', space=vmem, size = 0x4000, scoped, tag = 'input window, operand 0, single buffered']
    #allocation3 [shape = 's32[1]{0}', space=sflag, size = 0x4, scoped, tag = 'scoped memory for tpu_custom_call.1']
    #allocation4 [shape = 's32[1]{0}', space=sflag, size = 0x4, scoped, tag = 'scoped memory for tpu_custom_call.1']
    #allocation5 [shape = 'u8[8192]{0}', space=vmem, size = 0x2000, scoped, tag = 'input window, operand 1, single buffered']
    #allocation6 [shape = 's32[1]{0}', space=sflag, size = 0x4, scoped, tag = 'scoped memory for tpu_custom_call.1']
    #allocation7 [shape = 'u8[131072]{0}', space=vmem, size = 0x20000, scoped, tag = 'input window, operand 2, single buffered']
    #allocation8 [shape = 'u8[131072]{0}', space=vmem, size = 0x20000, scoped, tag = 'input window, operand 4, single buffered']
    #allocation9 [shape = 's32[1]{0}', space=sflag, size = 0x4, scoped, tag = 'scoped memory for tpu_custom_call.1']
    #allocation10 [shape = 'u8[65536]{0}', space=vmem, size = 0x10000, scoped, tag = 'input window, operand 6, single buffered']
    #allocation11 [shape = 'u8[65536]{0}', space=vmem, size = 0x10000, scoped, tag = 'input window, operand 8, single buffered']
    #allocation12 [shape = 's32[1]{0}', space=sflag, size = 0x4, scoped, tag = 'scoped memory for tpu_custom_call.1']
    #allocation13 [shape = 'u8[65536]{0}', space=vmem, size = 0x10000, scoped, tag = 'input window, operand 10, single buffered']
    #allocation14 [shape = 'u8[131072]{0}', space=vmem, size = 0x20000, scoped, tag = 'input window, operand 12, single buffered']
    #allocation15 [shape = 's32[1]{0}', space=sflag, size = 0x4, scoped, tag = 'scoped memory for tpu_custom_call.1']
    #allocation16 [shape = 'u8[131072]{0}', space=vmem, size = 0x20000, scoped, tag = 'input window, operand 14, single buffered']
    #allocation17 [shape = 'u8[8192]{0}', space=vmem, size = 0x2000, scoped, tag = 'output window, operand 0, single buffered']
    #allocation18 [shape = 'u8[8192]{0}', space=vmem, size = 0x2000, scoped, tag = 'output window, operand 1, single buffered']
    #allocation19 [shape = 's32[1]{0}', space=sflag, size = 0x4, scoped, tag = 'scoped memory for tpu_custom_call.1']
    #allocation20 [shape = 'u8[8192]{0}', space=vmem, size = 0x2000, scoped, tag = 'output window, operand 2, single buffered']
    #allocation21 [shape = 'u8[16384]{0}', space=vmem, size = 0x4000, scoped, tag = 'output window, operand 3, single buffered']
    #allocation22 [shape = 's32[1]{0}', space=sflag, size = 0x4, scoped, tag = 'scoped memory for tpu_custom_call.1']
    #allocation23 [shape = 'u8[4096]{0}', space=vmem, size = 0x1000, scoped, tag = 'output window, operand 4, single buffered']
    #allocation24 [shape = 'u8[4096]{0}', space=vmem, size = 0x1000, scoped, tag = 'output window, operand 5, single buffered']
    #allocation25 [shape = 's32[1]{0}', space=sflag, size = 0x4, scoped, tag = 'scoped memory for tpu_custom_call.1']
    %28 = vsyncpa [#allocation3], 0
    %29 = vsyncpa [#allocation6], 0
    %30 = vsyncpa [#allocation9], 0
    %31 = vsyncpa [#allocation12], 0
    %32 = vsyncpa [#allocation15], 0
    %33 = vsyncpa [#allocation4], 0
    %34 = vsyncpa [#allocation19], 0
    %35 = vsyncpa [#allocation22], 0
    %36 = vsyncpa [#allocation25], 0
    // Predicated region
    $region2: #{tpu_custom_call.1} parent=1 // pred_check
      _
    $region3: #{tpu_custom_call.1} parent=1 // pred_check_branch
      %38 = sbr.rel (0) target = $region5
    $region4: #{tpu_custom_call.1} parent=1 // pred_region
      %s40 = ssub.s32 512, 512
      %41 = vsyncadd [#allocation3], %s40
      %s42 = sshll.u32 [#allocation2], 4
      %s43 = int_to_ptr.vmem [resolvable:$true] %s42
      %48 = dma.hbm_to_vmem [thread:$0]  %s0, 512, %s43, [#allocation3], 256, 256, 16
    $region5: #{tpu_custom_call.1} parent=1 // pred_fallthru
      _
    // Predicated region
    $region6: #{tpu_custom_call.1} parent=1 // pred_check
      _
    $region7: #{tpu_custom_call.1} parent=1 // pred_check_branch
      %50 = sbr.rel (0) target = $region9
    $region8: #{tpu_custom_call.1} parent=1 // pred_region
      %s52 = ssub.s32 256, 256
      %53 = vsyncadd [#allocation6], %s52
      %s54 = sshll.u32 [#allocation5], 4
      %s55 = int_to_ptr.vmem [resolvable:$true] %s54
      %60 = dma.hbm_to_vmem [thread:$0]  %s1, 256, %s55, [#allocation6], 128, 128, 8
    $region9: #{tpu_custom_call.1} parent=1 // pred_fallthru
      _
    // Predicated region
    $region10: #{tpu_custom_call.1} parent=1 // pred_check
      _
    $region11: #{tpu_custom_call.1} parent=1 // pred_check_branch
      %62 = sbr.rel (0) target = $region13
    $region12: #{tpu_custom_call.1} parent=1 // pred_region
      %s64 = ssub.s32 4096, 4096
      %65 = vsyncadd [#allocation6], %s64
      %s66 = sshll.u32 [#allocation7], 4
      %s67 = int_to_ptr.vmem [resolvable:$true] %s66
      %72 = dma.hbm_to_vmem [thread:$0]  %s2, 4096, %s67, [#allocation6], 128, 128, 8
    $region13: #{tpu_custom_call.1} parent=1 // pred_fallthru
      _
    // Predicated region
    $region14: #{tpu_custom_call.1} parent=1 // pred_check
      _
    $region15: #{tpu_custom_call.1} parent=1 // pred_check_branch
      %74 = sbr.rel (0) target = $region17
    $region16: #{tpu_custom_call.1} parent=1 // pred_region
      _
    $region17: #{tpu_custom_call.1} parent=1 // pred_fallthru
      _
    // Predicated region
    $region18: #{tpu_custom_call.1} parent=1 // pred_check
      _
    $region19: #{tpu_custom_call.1} parent=1 // pred_check_branch
      %76 = sbr.rel (0) target = $region21
    $region20: #{tpu_custom_call.1} parent=1 // pred_region
      %s78 = ssub.s32 4096, 4096
      %79 = vsyncadd [#allocation9], %s78
      %s80 = sshll.u32 [#allocation8], 4
      %s81 = int_to_ptr.vmem [resolvable:$true] %s80
      %86 = dma.hbm_to_vmem [thread:$0]  %s4, 4096, %s81, [#allocation9], 128, 128, 8
    $region21: #{tpu_custom_call.1} parent=1 // pred_fallthru
      _
    // Predicated region
    $region22: #{tpu_custom_call.1} parent=1 // pred_check
      _
    $region23: #{tpu_custom_call.1} parent=1 // pred_check_branch
      %88 = sbr.rel (0) target = $region25
    $region24: #{tpu_custom_call.1} parent=1 // pred_region
      _
    $region25: #{tpu_custom_call.1} parent=1 // pred_fallthru
      _
    // Predicated region
    $region26: #{tpu_custom_call.1} parent=1 // pred_check
      _
    $region27: #{tpu_custom_call.1} parent=1 // pred_check_branch
      %90 = sbr.rel (0) target = $region29
    $region28: #{tpu_custom_call.1} parent=1 // pred_region
      %s92 = ssub.s32 2048, 2048
      %93 = vsyncadd [#allocation9], %s92
      %s94 = sshll.u32 [#allocation10], 4
      %s95 = int_to_ptr.vmem [resolvable:$true] %s94
      %100 = dma.hbm_to_vmem [thread:$0]  %s6, 2048, %s95, [#allocation9], 64, 64, 4
    $region29: #{tpu_custom_call.1} parent=1 // pred_fallthru
      _
    // Predicated region
    $region30: #{tpu_custom_call.1} parent=1 // pred_check
      _
    $region31: #{tpu_custom_call.1} parent=1 // pred_check_branch
      %102 = sbr.rel (0) target = $region33
    $region32: #{tpu_custom_call.1} parent=1 // pred_region
      _
    $region33: #{tpu_custom_call.1} parent=1 // pred_fallthru
      _
    // Predicated region
    $region34: #{tpu_custom_call.1} parent=1 // pred_check
      _
    $region35: #{tpu_custom_call.1} parent=1 // pred_check_branch
      %104 = sbr.rel (0) target = $region37
    $region36: #{tpu_custom_call.1} parent=1 // pred_region
      %s106 = ssub.s32 2048, 2048
      %107 = vsyncadd [#allocation12], %s106
      %s108 = sshll.u32 [#allocation11], 4
      %s109 = int_to_ptr.vmem [resolvable:$true] %s108
      %114 = dma.hbm_to_vmem [thread:$0]  %s8, 2048, %s109, [#allocation12], 64, 64, 4
    $region37: #{tpu_custom_call.1} parent=1 // pred_fallthru
      _
    // Predicated region
    $region38: #{tpu_custom_call.1} parent=1 // pred_check
      _
    $region39: #{tpu_custom_call.1} parent=1 // pred_check_branch
      %116 = sbr.rel (0) target = $region41
    $region40: #{tpu_custom_call.1} parent=1 // pred_region
      _
    $region41: #{tpu_custom_call.1} parent=1 // pred_fallthru
      _
    // Predicated region
    $region42: #{tpu_custom_call.1} parent=1 // pred_check
      _
    $region43: #{tpu_custom_call.1} parent=1 // pred_check_branch
      %118 = sbr.rel (0) target = $region45
    $region44: #{tpu_custom_call.1} parent=1 // pred_region
      %s120 = ssub.s32 2048, 2048
      %121 = vsyncadd [#allocation12], %s120
      %s122 = sshll.u32 [#allocation13], 4
      %s123 = int_to_ptr.vmem [resolvable:$true] %s122
      %128 = dma.hbm_to_vmem [thread:$0]  %s10, 2048, %s123, [#allocation12], 128, 128, 8
    $region45: #{tpu_custom_call.1} parent=1 // pred_fallthru
      _
    // Predicated region
    $region46: #{tpu_custom_call.1} parent=1 // pred_check
      _
    $region47: #{tpu_custom_call.1} parent=1 // pred_check_branch
      %130 = sbr.rel (0) target = $region49
    $region48: #{tpu_custom_call.1} parent=1 // pred_region
      _
    $region49: #{tpu_custom_call.1} parent=1 // pred_fallthru
      _
    // Predicated region
    $region50: #{tpu_custom_call.1} parent=1 // pred_check
      _
    $region51: #{tpu_custom_call.1} parent=1 // pred_check_branch
      %132 = sbr.rel (0) target = $region53
    $region52: #{tpu_custom_call.1} parent=1 // pred_region
      %s134 = ssub.s32 4096, 4096
      %135 = vsyncadd [#allocation15], %s134
      %s136 = sshll.u32 [#allocation14], 4
      %s137 = int_to_ptr.vmem [resolvable:$true] %s136
      %142 = dma.hbm_to_vmem [thread:$0]  %s12, 4096, %s137, [#allocation15], 128, 128, 8
    $region53: #{tpu_custom_call.1} parent=1 // pred_fallthru
      _
    // Predicated region
    $region54: #{tpu_custom_call.1} parent=1 // pred_check
      _
    $region55: #{tpu_custom_call.1} parent=1 // pred_check_branch
      %144 = sbr.rel (0) target = $region57
    $region56: #{tpu_custom_call.1} parent=1 // pred_region
      _
    $region57: #{tpu_custom_call.1} parent=1 // pred_fallthru
      _
    // Predicated region
    $region58: #{tpu_custom_call.1} parent=1 // pred_check
      _
    $region59: #{tpu_custom_call.1} parent=1 // pred_check_branch
      %146 = sbr.rel (0) target = $region61
    $region60: #{tpu_custom_call.1} parent=1 // pred_region
      %s148 = ssub.s32 4096, 4096
      %149 = vsyncadd [#allocation15], %s148
      %s150 = sshll.u32 [#allocation16], 4
      %s151 = int_to_ptr.vmem [resolvable:$true] %s150
      %156 = dma.hbm_to_vmem [thread:$0]  %s14, 4096, %s151, [#allocation15], 128, 128, 8
    $region61: #{tpu_custom_call.1} parent=1 // pred_fallthru
      _
    // Predicated region
    $region62: #{tpu_custom_call.1} parent=1 // pred_check
      _
    $region63: #{tpu_custom_call.1} parent=1 // pred_check_branch
      %158 = sbr.rel (0) target = $region65
    $region64: #{tpu_custom_call.1} parent=1 // pred_region
      _
    $region65: #{tpu_custom_call.1} parent=1 // pred_fallthru
      _
    // Predicated region
    $region66: #{tpu_custom_call.1} parent=1 // pred_check
      _
    $region67: #{tpu_custom_call.1} parent=1 // pred_check_branch
      %160 = sbr.rel (0) target = $region69
    $region68: #{tpu_custom_call.1} parent=1 // pred_region
      _
    $region69: #{tpu_custom_call.1} parent=1 // pred_fallthru
      _
    // Predicated region
    $region70: #{tpu_custom_call.1} parent=1 // pred_check
      _
    $region71: #{tpu_custom_call.1} parent=1 // pred_check_branch
      %162 = sbr.rel (0) target = $region73
    $region72: #{tpu_custom_call.1} parent=1 // pred_region
      %163 = dma.done [#allocation3], 512
    $region73: #{tpu_custom_call.1} parent=1 // pred_fallthru
      _
    // Predicated region
    $region74: #{tpu_custom_call.1} parent=1 // pred_check
      _
    $region75: #{tpu_custom_call.1} parent=1 // pred_check_branch
      %165 = sbr.rel (0) target = $region77
    $region76: #{tpu_custom_call.1} parent=1 // pred_region
      %166 = dma.done [#allocation6], 256
    $region77: #{tpu_custom_call.1} parent=1 // pred_fallthru
      _
    // Predicated region
    $region78: #{tpu_custom_call.1} parent=1 // pred_check
      _
    $region79: #{tpu_custom_call.1} parent=1 // pred_check_branch
      %168 = sbr.rel (0) target = $region81
    $region80: #{tpu_custom_call.1} parent=1 // pred_region
      %169 = dma.done [#allocation6], 4096
    $region81: #{tpu_custom_call.1} parent=1 // pred_fallthru
      _
    // Predicated region
    $region82: #{tpu_custom_call.1} parent=1 // pred_check
      _
    $region83: #{tpu_custom_call.1} parent=1 // pred_check_branch
      %171 = sbr.rel (0) target = $region85
    $region84: #{tpu_custom_call.1} parent=1 // pred_region
      %172 = dma.done [#allocation9], 4096
    $region85: #{tpu_custom_call.1} parent=1 // pred_fallthru
      _
    // Predicated region
    $region86: #{tpu_custom_call.1} parent=1 // pred_check
      _
    $region87: #{tpu_custom_call.1} parent=1 // pred_check_branch
      %174 = sbr.rel (0) target = $region89
    $region88: #{tpu_custom_call.1} parent=1 // pred_region
      %175 = dma.done [#allocation9], 2048
    $region89: #{tpu_custom_call.1} parent=1 // pred_fallthru
      _
    // Predicated region
    $region90: #{tpu_custom_call.1} parent=1 // pred_check
      _
    $region91: #{tpu_custom_call.1} parent=1 // pred_check_branch
      %177 = sbr.rel (0) target = $region93
    $region92: #{tpu_custom_call.1} parent=1 // pred_region
      %178 = dma.done [#allocation12], 2048
    $region93: #{tpu_custom_call.1} parent=1 // pred_fallthru
      _
    // Predicated region
    $region94: #{tpu_custom_call.1} parent=1 // pred_check
      _
    $region95: #{tpu_custom_call.1} parent=1 // pred_check_branch
      %180 = sbr.rel (0) target = $region97
    $region96: #{tpu_custom_call.1} parent=1 // pred_region
      %181 = dma.done [#allocation12], 2048
    $region97: #{tpu_custom_call.1} parent=1 // pred_fallthru
      _
    // Predicated region
    $region98: #{tpu_custom_call.1} parent=1 // pred_check
      _
    $region99: #{tpu_custom_call.1} parent=1 // pred_check_branch
      %183 = sbr.rel (0) target = $region101
    $region100: #{tpu_custom_call.1} parent=1 // pred_region
      %184 = dma.done [#allocation15], 4096
    $region101: #{tpu_custom_call.1} parent=1 // pred_fallthru
      _
    // Predicated region
    $region102: #{tpu_custom_call.1} parent=1 // pred_check
      _
    $region103: #{tpu_custom_call.1} parent=1 // pred_check_branch
      %186 = sbr.rel (0) target = $region105
    $region104: #{tpu_custom_call.1} parent=1 // pred_region
      %187 = dma.done [#allocation15], 4096
    $region105: #{tpu_custom_call.1} parent=1 // pred_fallthru
      _
    %v189 = vld [vmem:[#allocation2] sm:$0xff]
    %v190 = vld [vmem:[#allocation2 + $0x8] sm:$0xff]
    %v191 = vld [vmem:[#allocation2 + $0x10] sm:$0xff]
    %v192 = vld [vmem:[#allocation2 + $0x18] sm:$0xff]
    %v193 = vpack.c.bf16 %v191, %v189
    %v194 = vpack.c.bf16 %v192, %v190
    %v195 = vld [vmem:[#allocation7] sm:$0xff]
    %v196 = vld [vmem:[#allocation7 + $0x8] sm:$0xff]
    %v197 = vld [vmem:[#allocation7 + $0x10] sm:$0xff]
    %v198 = vld [vmem:[#allocation7 + $0x18] sm:$0xff]
    %v199 = vld [vmem:[#allocation7 + $0x20] sm:$0xff]
    %v200 = vld [vmem:[#allocation7 + $0x28] sm:$0xff]
    %v201 = vld [vmem:[#allocation7 + $0x30] sm:$0xff]
    %v202 = vld [vmem:[#allocation7 + $0x38] sm:$0xff]
    %v203 = vld [vmem:[#allocation7 + $0x40] sm:$0xff]
    %v204 = vld [vmem:[#allocation7 + $0x48] sm:$0xff]
    %v205 = vld [vmem:[#allocation7 + $0x50] sm:$0xff]
    %v206 = vld [vmem:[#allocation7 + $0x58] sm:$0xff]
    %v207 = vld [vmem:[#allocation7 + $0x60] sm:$0xff]
    %v208 = vld [vmem:[#allocation7 + $0x68] sm:$0xff]
    %v209 = vld [vmem:[#allocation7 + $0x70] sm:$0xff]
    %v210 = vld [vmem:[#allocation7 + $0x78] sm:$0xff]
    %v211 = vld [vmem:[#allocation7 + $0x80] sm:$0xff]
    %v212 = vld [vmem:[#allocation7 + $0x88] sm:$0xff]
    %v213 = vld [vmem:[#allocation7 + $0x90] sm:$0xff]
    %v214 = vld [vmem:[#allocation7 + $0x98] sm:$0xff]
    %v215 = vld [vmem:[#allocation7 + $0xa0] sm:$0xff]
    %v216 = vld [vmem:[#allocation7 + $0xa8] sm:$0xff]
    %v217 = vld [vmem:[#allocation7 + $0xb0] sm:$0xff]
    %v218 = vld [vmem:[#allocation7 + $0xb8] sm:$0xff]
    %v219 = vld [vmem:[#allocation7 + $0xc0] sm:$0xff]
    %v220 = vld [vmem:[#allocation7 + $0xc8] sm:$0xff]
    %v221 = vld [vmem:[#allocation7 + $0xd0] sm:$0xff]
    %v222 = vld [vmem:[#allocation7 + $0xd8] sm:$0xff]
    %v223 = vld [vmem:[#allocation7 + $0xe0] sm:$0xff]
    %v224 = vld [vmem:[#allocation7 + $0xe8] sm:$0xff]
    %v225 = vld [vmem:[#allocation7 + $0xf0] sm:$0xff]
    %v226 = vld [vmem:[#allocation7 + $0xf8] sm:$0xff]
    %v227 = vld [vmem:[%s3] sm:$0x3]
    %v229 = vlaneseq
    %v230 = vshrl.u32 %v229, 7
    %v231 = vsub.s32 0, %v230
    %v232 = vrot.slane %v227, %v231
    %v233 = vlaneseq
    %v234 = vshrl.u32 %v233, 7
    %v235 = vsub.s32 1, %v234
    %v236 = vrot.slane %v227, %v235
    %v271 = vunpack.c.l.b16 %v195
    %v272 = vunpack.c.h.b16 %v195
    %v273 = vunpack.c.l.b16 %v196
    %v274 = vunpack.c.h.b16 %v196
    %v275 = vunpack.c.l.b16 %v197
    %v276 = vunpack.c.h.b16 %v197
    %v277 = vunpack.c.l.b16 %v198
    %v278 = vunpack.c.h.b16 %v198
    %v279 = vunpack.c.l.b16 %v199
    %v280 = vunpack.c.h.b16 %v199
    %v281 = vunpack.c.l.b16 %v200
    %v282 = vunpack.c.h.b16 %v200
    %v283 = vunpack.c.l.b16 %v201
    %v284 = vunpack.c.h.b16 %v201
    %v285 = vunpack.c.l.b16 %v202
    %v286 = vunpack.c.h.b16 %v202
    %v287 = vunpack.c.l.b16 %v203
    %v288 = vunpack.c.h.b16 %v203
    %v289 = vunpack.c.l.b16 %v204
    %v290 = vunpack.c.h.b16 %v204
    %v291 = vunpack.c.l.b16 %v205
    %v292 = vunpack.c.h.b16 %v205
    %v293 = vunpack.c.l.b16 %v206
    %v294 = vunpack.c.h.b16 %v206
    %v295 = vunpack.c.l.b16 %v207
    %v296 = vunpack.c.h.b16 %v207
    %v297 = vunpack.c.l.b16 %v208
    %v298 = vunpack.c.h.b16 %v208
    %v299 = vunpack.c.l.b16 %v209
    %v300 = vunpack.c.h.b16 %v209
    %v301 = vunpack.c.l.b16 %v210
    %v302 = vunpack.c.h.b16 %v210
    %v303 = vunpack.c.l.b16 %v211
    %v304 = vunpack.c.h.b16 %v211
    %v305 = vunpack.c.l.b16 %v212
    %v306 = vunpack.c.h.b16 %v212
    %v307 = vunpack.c.l.b16 %v213
    %v308 = vunpack.c.h.b16 %v213
    %v309 = vunpack.c.l.b16 %v214
    %v310 = vunpack.c.h.b16 %v214
    %v311 = vunpack.c.l.b16 %v215
    %v312 = vunpack.c.h.b16 %v215
    %v313 = vunpack.c.l.b16 %v216
    %v314 = vunpack.c.h.b16 %v216
    %v315 = vunpack.c.l.b16 %v217
    %v316 = vunpack.c.h.b16 %v217
    %v317 = vunpack.c.l.b16 %v218
    %v318 = vunpack.c.h.b16 %v218
    %v319 = vunpack.c.l.b16 %v219
    %v320 = vunpack.c.h.b16 %v219
    %v321 = vunpack.c.l.b16 %v220
    %v322 = vunpack.c.h.b16 %v220
    %v323 = vunpack.c.l.b16 %v221
    %v324 = vunpack.c.h.b16 %v221
    %v325 = vunpack.c.l.b16 %v222
    %v326 = vunpack.c.h.b16 %v222
    %v327 = vunpack.c.l.b16 %v223
    %v328 = vunpack.c.h.b16 %v223
    %v329 = vunpack.c.l.b16 %v224
    %v330 = vunpack.c.h.b16 %v224
    %v331 = vunpack.c.l.b16 %v225
    %v332 = vunpack.c.h.b16 %v225
    %v333 = vunpack.c.l.b16 %v226
    %v334 = vunpack.c.h.b16 %v226
    %v335 = vpack.c.b16 %v273, %v271
    %v336 = vpack.c.b16 %v274, %v272
    %v337 = vpack.c.b16 %v277, %v275
    %v338 = vpack.c.b16 %v278, %v276
    %v339 = vpack.c.b16 %v281, %v279
    %v340 = vpack.c.b16 %v282, %v280
    %v341 = vpack.c.b16 %v285, %v283
    %v342 = vpack.c.b16 %v286, %v284
    %v343 = vpack.c.b16 %v289, %v287
    %v344 = vpack.c.b16 %v290, %v288
    %v345 = vpack.c.b16 %v293, %v291
    %v346 = vpack.c.b16 %v294, %v292
    %v347 = vpack.c.b16 %v297, %v295
    %v348 = vpack.c.b16 %v298, %v296
    %v349 = vpack.c.b16 %v301, %v299
    %v350 = vpack.c.b16 %v302, %v300
    %v351 = vpack.c.b16 %v305, %v303
    %v352 = vpack.c.b16 %v306, %v304
    %v353 = vpack.c.b16 %v309, %v307
    %v354 = vpack.c.b16 %v310, %v308
    %v355 = vpack.c.b16 %v313, %v311
    %v356 = vpack.c.b16 %v314, %v312
    %v357 = vpack.c.b16 %v317, %v315
    %v358 = vpack.c.b16 %v318, %v316
    %v359 = vpack.c.b16 %v321, %v319
    %v360 = vpack.c.b16 %v322, %v320
    %v361 = vpack.c.b16 %v325, %v323
    %v362 = vpack.c.b16 %v326, %v324
    %v363 = vpack.c.b16 %v329, %v327
    %v364 = vpack.c.b16 %v330, %v328
    %v365 = vpack.c.b16 %v333, %v331
    %v366 = vpack.c.b16 %v334, %v332
    %399 = vmatprep.subr.bf16.mxu0 %v336
    %400 = vmatpush1.bf16.msra.mxu0 %v335
    %401 = vmatprep.subr.bf16.mxu0 %v338
    %402 = vmatpush1.bf16.msra.mxu0 %v337
    %403 = vmatprep.subr.bf16.mxu0 %v340
    %404 = vmatpush1.bf16.msra.mxu0 %v339
    %405 = vmatprep.subr.bf16.mxu0 %v342
    %406 = vmatpush1.bf16.msra.mxu0 %v341
    %407 = vmatprep.subr.bf16.mxu0 %v344
    %408 = vmatpush1.bf16.msra.mxu0 %v343
    %409 = vmatprep.subr.bf16.mxu0 %v346
    %410 = vmatpush1.bf16.msra.mxu0 %v345
    %411 = vmatprep.subr.bf16.mxu0 %v348
    %412 = vmatpush1.bf16.msra.mxu0 %v347
    %413 = vmatprep.subr.bf16.mxu0 %v350
    %414 = vmatpush1.bf16.msra.mxu0 %v349
    %415 = vmatprep.subr.bf16.mxu0 %v352
    %416 = vmatpush1.bf16.msra.mxu0 %v351
    %417 = vmatprep.subr.bf16.mxu0 %v354
    %418 = vmatpush1.bf16.msra.mxu0 %v353
    %419 = vmatprep.subr.bf16.mxu0 %v356
    %420 = vmatpush1.bf16.msra.mxu0 %v355
    %421 = vmatprep.subr.bf16.mxu0 %v358
    %422 = vmatpush1.bf16.msra.mxu0 %v357
    %423 = vmatprep.subr.bf16.mxu0 %v360
    %424 = vmatpush1.bf16.msra.mxu0 %v359
    %425 = vmatprep.subr.bf16.mxu0 %v362
    %426 = vmatpush1.bf16.msra.mxu0 %v361
    %427 = vmatprep.subr.bf16.mxu0 %v364
    %428 = vmatpush1.bf16.msra.mxu0 %v363
    %429 = vmatprep.subr.bf16.mxu0 %v366
    %430 = vmatpush1.bf16.msra.mxu0 %v365
    %431 = vmatprep.mubr.bf16.mxu0 %v194
    %432 = vmatmul.mubr.bf16.gmra.mrb[0].mxu0 %v193
    %v433 = vpop.f32.mrb[0].mxu0
    %v434 = vadd.f32 %v232, %v433
    %v435 = vpop.f32.mrb[0].mxu0
    %v436 = vadd.f32 %v236, %v435
    %v437 = vpop.f32.mrb[0].mxu0
    %v438 = vadd.f32 %v232, %v437
    %v439 = vpop.f32.mrb[0].mxu0
    %v440 = vadd.f32 %v236, %v439
    %441 = vdwg.mxu0
    %v442 = vmul.f32 %v434, 0.01
    %v443 = vmul.f32 %v436, 0.01
    %v444 = vmul.f32 %v438, 0.01
    %v445 = vmul.f32 %v440, 0.01
    %v446 = vmax.f32 %v434, %v442
    %v447 = vmax.f32 %v436, %v443
    %v448 = vmax.f32 %v438, %v444
    %v449 = vmax.f32 %v440, %v445
    %v450 = vpack.c.bf16 %v448, %v446
    %v451 = vpack.c.bf16 %v449, %v447
    %v452 = vld [vmem:[#allocation8] sm:$0xff]
    %v453 = vld [vmem:[#allocation8 + $0x8] sm:$0xff]
    %v454 = vld [vmem:[#allocation8 + $0x10] sm:$0xff]
    %v455 = vld [vmem:[#allocation8 + $0x18] sm:$0xff]
    %v456 = vld [vmem:[#allocation8 + $0x20] sm:$0xff]
    %v457 = vld [vmem:[#allocation8 + $0x28] sm:$0xff]
    %v458 = vld [vmem:[#allocation8 + $0x30] sm:$0xff]
    %v459 = vld [vmem:[#allocation8 + $0x38] sm:$0xff]
    %v460 = vld [vmem:[#allocation8 + $0x40] sm:$0xff]
    %v461 = vld [vmem:[#allocation8 + $0x48] sm:$0xff]
    %v462 = vld [vmem:[#allocation8 + $0x50] sm:$0xff]
    %v463 = vld [vmem:[#allocation8 + $0x58] sm:$0xff]
    %v464 = vld [vmem:[#allocation8 + $0x60] sm:$0xff]
    %v465 = vld [vmem:[#allocation8 + $0x68] sm:$0xff]
    %v466 = vld [vmem:[#allocation8 + $0x70] sm:$0xff]
    %v467 = vld [vmem:[#allocation8 + $0x78] sm:$0xff]
    %v468 = vld [vmem:[#allocation8 + $0x80] sm:$0xff]
    %v469 = vld [vmem:[#allocation8 + $0x88] sm:$0xff]
    %v470 = vld [vmem:[#allocation8 + $0x90] sm:$0xff]
    %v471 = vld [vmem:[#allocation8 + $0x98] sm:$0xff]
    %v472 = vld [vmem:[#allocation8 + $0xa0] sm:$0xff]
    %v473 = vld [vmem:[#allocation8 + $0xa8] sm:$0xff]
    %v474 = vld [vmem:[#allocation8 + $0xb0] sm:$0xff]
    %v475 = vld [vmem:[#allocation8 + $0xb8] sm:$0xff]
    %v476 = vld [vmem:[#allocation8 + $0xc0] sm:$0xff]
    %v477 = vld [vmem:[#allocation8 + $0xc8] sm:$0xff]
    %v478 = vld [vmem:[#allocation8 + $0xd0] sm:$0xff]
    %v479 = vld [vmem:[#allocation8 + $0xd8] sm:$0xff]
    %v480 = vld [vmem:[#allocation8 + $0xe0] sm:$0xff]
    %v481 = vld [vmem:[#allocation8 + $0xe8] sm:$0xff]
    %v482 = vld [vmem:[#allocation8 + $0xf0] sm:$0xff]
    %v483 = vld [vmem:[#allocation8 + $0xf8] sm:$0xff]
    %v484 = vld [vmem:[%s5] sm:$0x3]
    %v486 = vlaneseq
    %v487 = vshrl.u32 %v486, 7
    %v488 = vsub.s32 0, %v487
    %v489 = vrot.slane %v484, %v488
    %v490 = vlaneseq
    %v491 = vshrl.u32 %v490, 7
    %v492 = vsub.s32 1, %v491
    %v493 = vrot.slane %v484, %v492
    %v528 = vunpack.c.l.b16 %v452
    %v529 = vunpack.c.h.b16 %v452
    %v530 = vunpack.c.l.b16 %v453
    %v531 = vunpack.c.h.b16 %v453
    %v532 = vunpack.c.l.b16 %v454
    %v533 = vunpack.c.h.b16 %v454
    %v534 = vunpack.c.l.b16 %v455
    %v535 = vunpack.c.h.b16 %v455
    %v536 = vunpack.c.l.b16 %v456
    %v537 = vunpack.c.h.b16 %v456
    %v538 = vunpack.c.l.b16 %v457
    %v539 = vunpack.c.h.b16 %v457
    %v540 = vunpack.c.l.b16 %v458
    %v541 = vunpack.c.h.b16 %v458
    %v542 = vunpack.c.l.b16 %v459
    %v543 = vunpack.c.h.b16 %v459
    %v544 = vunpack.c.l.b16 %v460
    %v545 = vunpack.c.h.b16 %v460
    %v546 = vunpack.c.l.b16 %v461
    %v547 = vunpack.c.h.b16 %v461
    %v548 = vunpack.c.l.b16 %v462
    %v549 = vunpack.c.h.b16 %v462
    %v550 = vunpack.c.l.b16 %v463
    %v551 = vunpack.c.h.b16 %v463
    %v552 = vunpack.c.l.b16 %v464
    %v553 = vunpack.c.h.b16 %v464
    %v554 = vunpack.c.l.b16 %v465
    %v555 = vunpack.c.h.b16 %v465
    %v556 = vunpack.c.l.b16 %v466
    %v557 = vunpack.c.h.b16 %v466
    %v558 = vunpack.c.l.b16 %v467
    %v559 = vunpack.c.h.b16 %v467
    %v560 = vunpack.c.l.b16 %v468
    %v561 = vunpack.c.h.b16 %v468
    %v562 = vunpack.c.l.b16 %v469
    %v563 = vunpack.c.h.b16 %v469
    %v564 = vunpack.c.l.b16 %v470
    %v565 = vunpack.c.h.b16 %v470
    %v566 = vunpack.c.l.b16 %v471
    %v567 = vunpack.c.h.b16 %v471
    %v568 = vunpack.c.l.b16 %v472
    %v569 = vunpack.c.h.b16 %v472
    %v570 = vunpack.c.l.b16 %v473
    %v571 = vunpack.c.h.b16 %v473
    %v572 = vunpack.c.l.b16 %v474
    %v573 = vunpack.c.h.b16 %v474
    %v574 = vunpack.c.l.b16 %v475
    %v575 = vunpack.c.h.b16 %v475
    %v576 = vunpack.c.l.b16 %v476
    %v577 = vunpack.c.h.b16 %v476
    %v578 = vunpack.c.l.b16 %v477
    %v579 = vunpack.c.h.b16 %v477
    %v580 = vunpack.c.l.b16 %v478
    %v581 = vunpack.c.h.b16 %v478
    %v582 = vunpack.c.l.b16 %v479
    %v583 = vunpack.c.h.b16 %v479
    %v584 = vunpack.c.l.b16 %v480
    %v585 = vunpack.c.h.b16 %v480
    %v586 = vunpack.c.l.b16 %v481
    %v587 = vunpack.c.h.b16 %v481
    %v588 = vunpack.c.l.b16 %v482
    %v589 = vunpack.c.h.b16 %v482
    %v590 = vunpack.c.l.b16 %v483
    %v591 = vunpack.c.h.b16 %v483
    %v592 = vpack.c.b16 %v530, %v528
    %v593 = vpack.c.b16 %v531, %v529
    %v594 = vpack.c.b16 %v534, %v532
    %v595 = vpack.c.b16 %v535, %v533
    %v596 = vpack.c.b16 %v538, %v536
    %v597 = vpack.c.b16 %v539, %v537
    %v598 = vpack.c.b16 %v542, %v540
    %v599 = vpack.c.b16 %v543, %v541
    %v600 = vpack.c.b16 %v546, %v544
    %v601 = vpack.c.b16 %v547, %v545
    %v602 = vpack.c.b16 %v550, %v548
    %v603 = vpack.c.b16 %v551, %v549
    %v604 = vpack.c.b16 %v554, %v552
    %v605 = vpack.c.b16 %v555, %v553
    %v606 = vpack.c.b16 %v558, %v556
    %v607 = vpack.c.b16 %v559, %v557
    %v608 = vpack.c.b16 %v562, %v560
    %v609 = vpack.c.b16 %v563, %v561
    %v610 = vpack.c.b16 %v566, %v564
    %v611 = vpack.c.b16 %v567, %v565
    %v612 = vpack.c.b16 %v570, %v568
    %v613 = vpack.c.b16 %v571, %v569
    %v614 = vpack.c.b16 %v574, %v572
    %v615 = vpack.c.b16 %v575, %v573
    %v616 = vpack.c.b16 %v578, %v576
    %v617 = vpack.c.b16 %v579, %v577
    %v618 = vpack.c.b16 %v582, %v580
    %v619 = vpack.c.b16 %v583, %v581
    %v620 = vpack.c.b16 %v586, %v584
    %v621 = vpack.c.b16 %v587, %v585
    %v622 = vpack.c.b16 %v590, %v588
    %v623 = vpack.c.b16 %v591, %v589
    %656 = vmatprep.subr.bf16.mxu0 %v593
    %657 = vmatpush1.bf16.msra.mxu0 %v592
    %658 = vmatprep.subr.bf16.mxu0 %v595
    %659 = vmatpush1.bf16.msra.mxu0 %v594
    %660 = vmatprep.subr.bf16.mxu0 %v597
    %661 = vmatpush1.bf16.msra.mxu0 %v596
    %662 = vmatprep.subr.bf16.mxu0 %v599
    %663 = vmatpush1.bf16.msra.mxu0 %v598
    %664 = vmatprep.subr.bf16.mxu0 %v601
    %665 = vmatpush1.bf16.msra.mxu0 %v600
    %666 = vmatprep.subr.bf16.mxu0 %v603
    %667 = vmatpush1.bf16.msra.mxu0 %v602
    %668 = vmatprep.subr.bf16.mxu0 %v605
    %669 = vmatpush1.bf16.msra.mxu0 %v604
    %670 = vmatprep.subr.bf16.mxu0 %v607
    %671 = vmatpush1.bf16.msra.mxu0 %v606
    %672 = vmatprep.subr.bf16.mxu0 %v609
    %673 = vmatpush1.bf16.msra.mxu0 %v608
    %674 = vmatprep.subr.bf16.mxu0 %v611
    %675 = vmatpush1.bf16.msra.mxu0 %v610
    %676 = vmatprep.subr.bf16.mxu0 %v613
    %677 = vmatpush1.bf16.msra.mxu0 %v612
    %678 = vmatprep.subr.bf16.mxu0 %v615
    %679 = vmatpush1.bf16.msra.mxu0 %v614
    %680 = vmatprep.subr.bf16.mxu0 %v617
    %681 = vmatpush1.bf16.msra.mxu0 %v616
    %682 = vmatprep.subr.bf16.mxu0 %v619
    %683 = vmatpush1.bf16.msra.mxu0 %v618
    %684 = vmatprep.subr.bf16.mxu0 %v621
    %685 = vmatpush1.bf16.msra.mxu0 %v620
    %686 = vmatprep.subr.bf16.mxu0 %v623
    %687 = vmatpush1.bf16.msra.mxu0 %v622
    %688 = vmatprep.mubr.bf16.mxu0 %v451
    %689 = vmatmul.mubr.bf16.gmra.mrb[0].mxu0 %v450
    %v690 = vpop.f32.mrb[0].mxu0
    %v691 = vadd.f32 %v489, %v690
    %v692 = vpop.f32.mrb[0].mxu0
    %v693 = vadd.f32 %v493, %v692
    %v694 = vpop.f32.mrb[0].mxu0
    %v695 = vadd.f32 %v489, %v694
    %v696 = vpop.f32.mrb[0].mxu0
    %v697 = vadd.f32 %v493, %v696
    %698 = vdwg.mxu0
    %v699 = vmul.f32 %v691, 0.01
    %v700 = vmul.f32 %v693, 0.01
    %v701 = vmul.f32 %v695, 0.01
    %v702 = vmul.f32 %v697, 0.01
    %v703 = vmax.f32 %v691, %v699
    %v704 = vmax.f32 %v693, %v700
    %v705 = vmax.f32 %v695, %v701
    %v706 = vmax.f32 %v697, %v702
    %v707 = vpack.c.bf16 %v705, %v703
    %v708 = vpack.c.bf16 %v706, %v704
    %v709 = vld [vmem:[#allocation10] sm:$0xf]
    %v710 = vld [vmem:[#allocation10 + $0x4] sm:$0xf]
    %v711 = vld [vmem:[#allocation10 + $0x8] sm:$0xf]
    %v712 = vld [vmem:[#allocation10 + $0xc] sm:$0xf]
    %v713 = vld [vmem:[#allocation10 + $0x10] sm:$0xf]
    %v714 = vld [vmem:[#allocation10 + $0x14] sm:$0xf]
    %v715 = vld [vmem:[#allocation10 + $0x18] sm:$0xf]
    %v716 = vld [vmem:[#allocation10 + $0x1c] sm:$0xf]
    %v717 = vld [vmem:[#allocation10 + $0x20] sm:$0xf]
    %v718 = vld [vmem:[#allocation10 + $0x24] sm:$0xf]
    %v719 = vld [vmem:[#allocation10 + $0x28] sm:$0xf]
    %v720 = vld [vmem:[#allocation10 + $0x2c] sm:$0xf]
    %v721 = vld [vmem:[#allocation10 + $0x30] sm:$0xf]
    %v722 = vld [vmem:[#allocation10 + $0x34] sm:$0xf]
    %v723 = vld [vmem:[#allocation10 + $0x38] sm:$0xf]
    %v724 = vld [vmem:[#allocation10 + $0x3c] sm:$0xf]
    %v725 = vld [vmem:[#allocation10 + $0x40] sm:$0xf]
    %v726 = vld [vmem:[#allocation10 + $0x44] sm:$0xf]
    %v727 = vld [vmem:[#allocation10 + $0x48] sm:$0xf]
    %v728 = vld [vmem:[#allocation10 + $0x4c] sm:$0xf]
    %v729 = vld [vmem:[#allocation10 + $0x50] sm:$0xf]
    %v730 = vld [vmem:[#allocation10 + $0x54] sm:$0xf]
    %v731 = vld [vmem:[#allocation10 + $0x58] sm:$0xf]
    %v732 = vld [vmem:[#allocation10 + $0x5c] sm:$0xf]
    %v733 = vld [vmem:[#allocation10 + $0x60] sm:$0xf]
    %v734 = vld [vmem:[#allocation10 + $0x64] sm:$0xf]
    %v735 = vld [vmem:[#allocation10 + $0x68] sm:$0xf]
    %v736 = vld [vmem:[#allocation10 + $0x6c] sm:$0xf]
    %v737 = vld [vmem:[#allocation10 + $0x70] sm:$0xf]
    %v738 = vld [vmem:[#allocation10 + $0x74] sm:$0xf]
    %v739 = vld [vmem:[#allocation10 + $0x78] sm:$0xf]
    %v740 = vld [vmem:[#allocation10 + $0x7c] sm:$0xf]
    %v741 = vld [vmem:[%s7] sm:$0x1]
    %v743 = vlaneseq
    %v744 = vshrl.u32 %v743, 7
    %v745 = vsub.s32 0, %v744
    %v746 = vrot.slane %v741, %v745
    %v780 = vunpack.c.l.b16 %v709
    %v781 = vunpack.c.l.b16 %v710
    %v782 = vunpack.c.l.b16 %v711
    %v783 = vunpack.c.l.b16 %v712
    %v784 = vunpack.c.l.b16 %v713
    %v785 = vunpack.c.l.b16 %v714
    %v786 = vunpack.c.l.b16 %v715
    %v787 = vunpack.c.l.b16 %v716
    %v788 = vunpack.c.l.b16 %v717
    %v789 = vunpack.c.l.b16 %v718
    %v790 = vunpack.c.l.b16 %v719
    %v791 = vunpack.c.l.b16 %v720
    %v792 = vunpack.c.l.b16 %v721
    %v793 = vunpack.c.l.b16 %v722
    %v794 = vunpack.c.l.b16 %v723
    %v795 = vunpack.c.l.b16 %v724
    %v796 = vunpack.c.l.b16 %v725
    %v797 = vunpack.c.l.b16 %v726
    %v798 = vunpack.c.l.b16 %v727
    %v799 = vunpack.c.l.b16 %v728
    %v800 = vunpack.c.l.b16 %v729
    %v801 = vunpack.c.l.b16 %v730
    %v802 = vunpack.c.l.b16 %v731
    %v803 = vunpack.c.l.b16 %v732
    %v804 = vunpack.c.l.b16 %v733
    %v805 = vunpack.c.l.b16 %v734
    %v806 = vunpack.c.l.b16 %v735
    %v807 = vunpack.c.l.b16 %v736
    %v808 = vunpack.c.l.b16 %v737
    %v809 = vunpack.c.l.b16 %v738
    %v810 = vunpack.c.l.b16 %v739
    %v811 = vunpack.c.l.b16 %v740
    %v812 = vpack.c.b16 %v781, %v780
    %v813 = vpack.c.b16 %v783, %v782
    %v814 = vpack.c.b16 %v785, %v784
    %v815 = vpack.c.b16 %v787, %v786
    %v816 = vpack.c.b16 %v789, %v788
    %v817 = vpack.c.b16 %v791, %v790
    %v818 = vpack.c.b16 %v793, %v792
    %v819 = vpack.c.b16 %v795, %v794
    %v820 = vpack.c.b16 %v797, %v796
    %v821 = vpack.c.b16 %v799, %v798
    %v822 = vpack.c.b16 %v801, %v800
    %v823 = vpack.c.b16 %v803, %v802
    %v824 = vpack.c.b16 %v805, %v804
    %v825 = vpack.c.b16 %v807, %v806
    %v826 = vpack.c.b16 %v809, %v808
    %v827 = vpack.c.b16 %v811, %v810
    %844 = vmatprep.subr.bf16.mxu0 0
    %845 = vmatpush1.bf16.msra.mxu0 %v812
    %846 = vmatprep.subr.bf16.mxu0 0
    %847 = vmatpush1.bf16.msra.mxu0 %v813
    %848 = vmatprep.subr.bf16.mxu0 0
    %849 = vmatpush1.bf16.msra.mxu0 %v814
    %850 = vmatprep.subr.bf16.mxu0 0
    %851 = vmatpush1.bf16.msra.mxu0 %v815
    %852 = vmatprep.subr.bf16.mxu0 0
    %853 = vmatpush1.bf16.msra.mxu0 %v816
    %854 = vmatprep.subr.bf16.mxu0 0
    %855 = vmatpush1.bf16.msra.mxu0 %v817
    %856 = vmatprep.subr.bf16.mxu0 0
    %857 = vmatpush1.bf16.msra.mxu0 %v818
    %858 = vmatprep.subr.bf16.mxu0 0
    %859 = vmatpush1.bf16.msra.mxu0 %v819
    %860 = vmatprep.subr.bf16.mxu0 0
    %861 = vmatpush1.bf16.msra.mxu0 %v820
    %862 = vmatprep.subr.bf16.mxu0 0
    %863 = vmatpush1.bf16.msra.mxu0 %v821
    %864 = vmatprep.subr.bf16.mxu0 0
    %865 = vmatpush1.bf16.msra.mxu0 %v822
    %866 = vmatprep.subr.bf16.mxu0 0
    %867 = vmatpush1.bf16.msra.mxu0 %v823
    %868 = vmatprep.subr.bf16.mxu0 0
    %869 = vmatpush1.bf16.msra.mxu0 %v824
    %870 = vmatprep.subr.bf16.mxu0 0
    %871 = vmatpush1.bf16.msra.mxu0 %v825
    %872 = vmatprep.subr.bf16.mxu0 0
    %873 = vmatpush1.bf16.msra.mxu0 %v826
    %874 = vmatprep.subr.bf16.mxu0 0
    %875 = vmatpush1.bf16.msra.mxu0 %v827
    %876 = vmatprep.mubr.bf16.mxu0 %v708
    %877 = vmatmul.mubr.bf16.gmra.mrb[0].mxu0 %v707
    %v878 = vpop.f32.mrb[0].mxu0
    %v879 = vadd.f32 %v746, %v878
    %v880 = vpop.f32.mrb[0].mxu0
    %v881 = vpop.f32.mrb[0].mxu0
    %v882 = vadd.f32 %v746, %v881
    %v883 = vpop.f32.mrb[0].mxu0
    %884 = vdwg.mxu0
    %v885 = vld [vmem:[#allocation11] sm:$0xf]
    %v886 = vld [vmem:[#allocation11 + $0x4] sm:$0xf]
    %v887 = vld [vmem:[#allocation11 + $0x8] sm:$0xf]
    %v888 = vld [vmem:[#allocation11 + $0xc] sm:$0xf]
    %v889 = vld [vmem:[#allocation11 + $0x10] sm:$0xf]
    %v890 = vld [vmem:[#allocation11 + $0x14] sm:$0xf]
    %v891 = vld [vmem:[#allocation11 + $0x18] sm:$0xf]
    %v892 = vld [vmem:[#allocation11 + $0x1c] sm:$0xf]
    %v893 = vld [vmem:[#allocation11 + $0x20] sm:$0xf]
    %v894 = vld [vmem:[#allocation11 + $0x24] sm:$0xf]
    %v895 = vld [vmem:[#allocation11 + $0x28] sm:$0xf]
    %v896 = vld [vmem:[#allocation11 + $0x2c] sm:$0xf]
    %v897 = vld [vmem:[#allocation11 + $0x30] sm:$0xf]
    %v898 = vld [vmem:[#allocation11 + $0x34] sm:$0xf]
    %v899 = vld [vmem:[#allocation11 + $0x38] sm:$0xf]
    %v900 = vld [vmem:[#allocation11 + $0x3c] sm:$0xf]
    %v901 = vld [vmem:[#allocation11 + $0x40] sm:$0xf]
    %v902 = vld [vmem:[#allocation11 + $0x44] sm:$0xf]
    %v903 = vld [vmem:[#allocation11 + $0x48] sm:$0xf]
    %v904 = vld [vmem:[#allocation11 + $0x4c] sm:$0xf]
    %v905 = vld [vmem:[#allocation11 + $0x50] sm:$0xf]
    %v906 = vld [vmem:[#allocation11 + $0x54] sm:$0xf]
    %v907 = vld [vmem:[#allocation11 + $0x58] sm:$0xf]
    %v908 = vld [vmem:[#allocation11 + $0x5c] sm:$0xf]
    %v909 = vld [vmem:[#allocation11 + $0x60] sm:$0xf]
    %v910 = vld [vmem:[#allocation11 + $0x64] sm:$0xf]
    %v911 = vld [vmem:[#allocation11 + $0x68] sm:$0xf]
    %v912 = vld [vmem:[#allocation11 + $0x6c] sm:$0xf]
    %v913 = vld [vmem:[#allocation11 + $0x70] sm:$0xf]
    %v914 = vld [vmem:[#allocation11 + $0x74] sm:$0xf]
    %v915 = vld [vmem:[#allocation11 + $0x78] sm:$0xf]
    %v916 = vld [vmem:[#allocation11 + $0x7c] sm:$0xf]
    %v917 = vld [vmem:[%s9] sm:$0x1]
    %v919 = vlaneseq
    %v920 = vshrl.u32 %v919, 7
    %v921 = vsub.s32 0, %v920
    %v922 = vrot.slane %v917, %v921
    %v956 = vunpack.c.l.b16 %v885
    %v957 = vunpack.c.l.b16 %v886
    %v958 = vunpack.c.l.b16 %v887
    %v959 = vunpack.c.l.b16 %v888
    %v960 = vunpack.c.l.b16 %v889
    %v961 = vunpack.c.l.b16 %v890
    %v962 = vunpack.c.l.b16 %v891
    %v963 = vunpack.c.l.b16 %v892
    %v964 = vunpack.c.l.b16 %v893
    %v965 = vunpack.c.l.b16 %v894
    %v966 = vunpack.c.l.b16 %v895
    %v967 = vunpack.c.l.b16 %v896
    %v968 = vunpack.c.l.b16 %v897
    %v969 = vunpack.c.l.b16 %v898
    %v970 = vunpack.c.l.b16 %v899
    %v971 = vunpack.c.l.b16 %v900
    %v972 = vunpack.c.l.b16 %v901
    %v973 = vunpack.c.l.b16 %v902
    %v974 = vunpack.c.l.b16 %v903
    %v975 = vunpack.c.l.b16 %v904
    %v976 = vunpack.c.l.b16 %v905
    %v977 = vunpack.c.l.b16 %v906
    %v978 = vunpack.c.l.b16 %v907
    %v979 = vunpack.c.l.b16 %v908
    %v980 = vunpack.c.l.b16 %v909
    %v981 = vunpack.c.l.b16 %v910
    %v982 = vunpack.c.l.b16 %v911
    %v983 = vunpack.c.l.b16 %v912
    %v984 = vunpack.c.l.b16 %v913
    %v985 = vunpack.c.l.b16 %v914
    %v986 = vunpack.c.l.b16 %v915
    %v987 = vunpack.c.l.b16 %v916
    %v988 = vpack.c.b16 %v957, %v956
    %v989 = vpack.c.b16 %v959, %v958
    %v990 = vpack.c.b16 %v961, %v960
    %v991 = vpack.c.b16 %v963, %v962
    %v992 = vpack.c.b16 %v965, %v964
    %v993 = vpack.c.b16 %v967, %v966
    %v994 = vpack.c.b16 %v969, %v968
    %v995 = vpack.c.b16 %v971, %v970
    %v996 = vpack.c.b16 %v973, %v972
    %v997 = vpack.c.b16 %v975, %v974
    %v998 = vpack.c.b16 %v977, %v976
    %v999 = vpack.c.b16 %v979, %v978
    %v1000 = vpack.c.b16 %v981, %v980
    %v1001 = vpack.c.b16 %v983, %v982
    %v1002 = vpack.c.b16 %v985, %v984
    %v1003 = vpack.c.b16 %v987, %v986
    %1020 = vmatprep.subr.bf16.mxu0 0
    %1021 = vmatpush1.bf16.msra.mxu0 %v988
    %1022 = vmatprep.subr.bf16.mxu0 0
    %1023 = vmatpush1.bf16.msra.mxu0 %v989
    %1024 = vmatprep.subr.bf16.mxu0 0
    %1025 = vmatpush1.bf16.msra.mxu0 %v990
    %1026 = vmatprep.subr.bf16.mxu0 0
    %1027 = vmatpush1.bf16.msra.mxu0 %v991
    %1028 = vmatprep.subr.bf16.mxu0 0
    %1029 = vmatpush1.bf16.msra.mxu0 %v992
    %1030 = vmatprep.subr.bf16.mxu0 0
    %1031 = vmatpush1.bf16.msra.mxu0 %v993
    %1032 = vmatprep.subr.bf16.mxu0 0
    %1033 = vmatpush1.bf16.msra.mxu0 %v994
    %1034 = vmatprep.subr.bf16.mxu0 0
    %1035 = vmatpush1.bf16.msra.mxu0 %v995
    %1036 = vmatprep.subr.bf16.mxu0 0
    %1037 = vmatpush1.bf16.msra.mxu0 %v996
    %1038 = vmatprep.subr.bf16.mxu0 0
    %1039 = vmatpush1.bf16.msra.mxu0 %v997
    %1040 = vmatprep.subr.bf16.mxu0 0
    %1041 = vmatpush1.bf16.msra.mxu0 %v998
    %1042 = vmatprep.subr.bf16.mxu0 0
    %1043 = vmatpush1.bf16.msra.mxu0 %v999
    %1044 = vmatprep.subr.bf16.mxu0 0
    %1045 = vmatpush1.bf16.msra.mxu0 %v1000
    %1046 = vmatprep.subr.bf16.mxu0 0
    %1047 = vmatpush1.bf16.msra.mxu0 %v1001
    %1048 = vmatprep.subr.bf16.mxu0 0
    %1049 = vmatpush1.bf16.msra.mxu0 %v1002
    %1050 = vmatprep.subr.bf16.mxu0 0
    %1051 = vmatpush1.bf16.msra.mxu0 %v1003
    %1052 = vmatprep.mubr.bf16.mxu0 %v708
    %1053 = vmatmul.mubr.bf16.gmra.mrb[0].mxu0 %v707
    %v1054 = vpop.f32.mrb[0].mxu0
    %v1055 = vadd.f32 %v922, %v1054
    %v1056 = vpop.f32.mrb[0].mxu0
    %v1057 = vpop.f32.mrb[0].mxu0
    %v1058 = vadd.f32 %v922, %v1057
    %v1059 = vpop.f32.mrb[0].mxu0
    %1060 = vdwg.mxu0
    %v1061 = vmul.f32 %v1055, 0.5
    %v1062 = vmul.f32 %v1058, 0.5
    %v1063 = vmul.f32 %v1061, 1.442695
    %v1064 = vpow.pop %v1063
    %v1065 = vmul.f32 %v1062, 1.442695
    %v1066 = vpow.pop %v1065
    %v1067 = vld [vmem:[#allocation5] sm:$0xff]
    %v1068 = vld [vmem:[#allocation5 + $0x8] sm:$0xff]
    %v1069 = vmul.f32 %v1067, %v1064
    %v1070 = vmul.f32 %v1068, %v1066
    %v1071 = vadd.f32 %v879, %v1069
    %v1072 = vadd.f32 %v882, %v1070
    %1073 = vst [vmem:[#allocation17] sm:$0xff] %v879
    %1074 = vst [vmem:[#allocation17 + $0x8] sm:$0xff] %v882
    %1075 = vst [vmem:[#allocation18] sm:$0xff] %v1055
    %1076 = vst [vmem:[#allocation18 + $0x8] sm:$0xff] %v1058
    %1077 = vst [vmem:[#allocation20] sm:$0xff] %v1071
    %1078 = vst [vmem:[#allocation20 + $0x8] sm:$0xff] %v1072
    %v1079 = vadd.f32 %v1055, 1.0
    %v1080 = vadd.f32 %v1058, 1.0
    %v1081 = vmul.f32 %v879, %v879
    %v1082 = vmul.f32 %v882, %v882
    %v1083 = vsub.f32 %v1079, %v1081
    %v1084 = vsub.f32 %v1080, %v1082
    %v1085 = vmul.f32 %v1055, 1.442695
    %v1086 = vpow.pop %v1085
    %v1087 = vmul.f32 %v1058, 1.442695
    %v1088 = vpow.pop %v1087
    %v1089 = vsub.f32 %v1083, %v1086
    %v1090 = vsub.f32 %v1084, %v1088
    %v1091 = vmul.f32 %v1089, -0.5
    %v1092 = vmul.f32 %v1090, -0.5
    %v1093 = vadd.f32 %v1091, %v1092
    %1094 = vadd.xlane.f32.xlu0 %v1093
    %v1095 = vpop.xlane.xlu0 %1094
    %v1096 = vrot.slane %v1095, 4
    %v1097 = vadd.f32 %v1095, %v1096
    %v1098 = vrot.slane %v1097, 2
    %v1099 = vadd.f32 %v1097, %v1098
    %v1100 = vrot.slane %v1099, 1
    %v1101 = vadd.f32 %v1099, %v1100
    %s1102 = vtos %v1101
    %v1103 = vstv %s1102
    %1104 = vst [vmem:[#allocation23] sm:$0xff] %v1103
    %v1105 = vpack.c.bf16 %v1072, %v1071
    %v1106 = vld [vmem:[#allocation13] sm:$0xff]
    %v1107 = vld [vmem:[#allocation13 + $0x8] sm:$0xff]
    %v1108 = vld [vmem:[#allocation13 + $0x10] sm:$0xff]
    %v1109 = vld [vmem:[#allocation13 + $0x18] sm:$0xff]
    %v1110 = vld [vmem:[#allocation13 + $0x20] sm:$0xff]
    %v1111 = vld [vmem:[#allocation13 + $0x28] sm:$0xff]
    %v1112 = vld [vmem:[#allocation13 + $0x30] sm:$0xff]
    %v1113 = vld [vmem:[#allocation13 + $0x38] sm:$0xff]
    %v1114 = vld [vmem:[#allocation13 + $0x40] sm:$0xff]
    %v1115 = vld [vmem:[#allocation13 + $0x48] sm:$0xff]
    %v1116 = vld [vmem:[#allocation13 + $0x50] sm:$0xff]
    %v1117 = vld [vmem:[#allocation13 + $0x58] sm:$0xff]
    %v1118 = vld [vmem:[#allocation13 + $0x60] sm:$0xff]
    %v1119 = vld [vmem:[#allocation13 + $0x68] sm:$0xff]
    %v1120 = vld [vmem:[#allocation13 + $0x70] sm:$0xff]
    %v1121 = vld [vmem:[#allocation13 + $0x78] sm:$0xff]
    %v1122 = vld [vmem:[%s11] sm:$0x3]
    %v1124 = vlaneseq
    %v1125 = vshrl.u32 %v1124, 7
    %v1126 = vsub.s32 0, %v1125
    %v1127 = vrot.slane %v1122, %v1126
    %v1128 = vlaneseq
    %v1129 = vshrl.u32 %v1128, 7
    %v1130 = vsub.s32 1, %v1129
    %v1131 = vrot.slane %v1122, %v1130
    %v1150 = vunpack.c.l.b16 %v1106
    %v1151 = vunpack.c.h.b16 %v1106
    %v1152 = vunpack.c.l.b16 %v1107
    %v1153 = vunpack.c.h.b16 %v1107
    %v1154 = vunpack.c.l.b16 %v1108
    %v1155 = vunpack.c.h.b16 %v1108
    %v1156 = vunpack.c.l.b16 %v1109
    %v1157 = vunpack.c.h.b16 %v1109
    %v1158 = vunpack.c.l.b16 %v1110
    %v1159 = vunpack.c.h.b16 %v1110
    %v1160 = vunpack.c.l.b16 %v1111
    %v1161 = vunpack.c.h.b16 %v1111
    %v1162 = vunpack.c.l.b16 %v1112
    %v1163 = vunpack.c.h.b16 %v1112
    %v1164 = vunpack.c.l.b16 %v1113
    %v1165 = vunpack.c.h.b16 %v1113
    %v1166 = vunpack.c.l.b16 %v1114
    %v1167 = vunpack.c.h.b16 %v1114
    %v1168 = vunpack.c.l.b16 %v1115
    %v1169 = vunpack.c.h.b16 %v1115
    %v1170 = vunpack.c.l.b16 %v1116
    %v1171 = vunpack.c.h.b16 %v1116
    %v1172 = vunpack.c.l.b16 %v1117
    %v1173 = vunpack.c.h.b16 %v1117
    %v1174 = vunpack.c.l.b16 %v1118
    %v1175 = vunpack.c.h.b16 %v1118
    %v1176 = vunpack.c.l.b16 %v1119
    %v1177 = vunpack.c.h.b16 %v1119
    %v1178 = vunpack.c.l.b16 %v1120
    %v1179 = vunpack.c.h.b16 %v1120
    %v1180 = vunpack.c.l.b16 %v1121
    %v1181 = vunpack.c.h.b16 %v1121
    %v1182 = vpack.c.b16 %v1152, %v1150
    %v1183 = vpack.c.b16 %v1153, %v1151
    %v1184 = vpack.c.b16 %v1156, %v1154
    %v1185 = vpack.c.b16 %v1157, %v1155
    %v1186 = vpack.c.b16 %v1160, %v1158
    %v1187 = vpack.c.b16 %v1161, %v1159
    %v1188 = vpack.c.b16 %v1164, %v1162
    %v1189 = vpack.c.b16 %v1165, %v1163
    %v1190 = vpack.c.b16 %v1168, %v1166
    %v1191 = vpack.c.b16 %v1169, %v1167
    %v1192 = vpack.c.b16 %v1172, %v1170
    %v1193 = vpack.c.b16 %v1173, %v1171
    %v1194 = vpack.c.b16 %v1176, %v1174
    %v1195 = vpack.c.b16 %v1177, %v1175
    %v1196 = vpack.c.b16 %v1180, %v1178
    %v1197 = vpack.c.b16 %v1181, %v1179
    %1214 = vmatprep.subr.bf16.mxu0 %v1183
    %1215 = vmatpush1.bf16.msra.mxu0 %v1182
    %1216 = vmatprep.subr.bf16.mxu0 %v1185
    %1217 = vmatpush1.bf16.msra.mxu0 %v1184
    %1218 = vmatprep.subr.bf16.mxu0 %v1187
    %1219 = vmatpush1.bf16.msra.mxu0 %v1186
    %1220 = vmatprep.subr.bf16.mxu0 %v1189
    %1221 = vmatpush1.bf16.msra.mxu0 %v1188
    %1222 = vmatprep.subr.bf16.mxu0 %v1191
    %1223 = vmatpush1.bf16.msra.mxu0 %v1190
    %1224 = vmatprep.subr.bf16.mxu0 %v1193
    %1225 = vmatpush1.bf16.msra.mxu0 %v1192
    %1226 = vmatprep.subr.bf16.mxu0 %v1195
    %1227 = vmatpush1.bf16.msra.mxu0 %v1194
    %1228 = vmatprep.subr.bf16.mxu0 %v1197
    %1229 = vmatpush1.bf16.msra.mxu0 %v1196
    %1230 = vmatprep.subr.bf16.mxu0 0
    %1231 = vmatpush1.bf16.msra.mxu0 0
    %1232 = vmatprep.subr.bf16.mxu0 0
    %1233 = vmatpush1.bf16.msra.mxu0 0
    %1234 = vmatprep.subr.bf16.mxu0 0
    %1235 = vmatpush1.bf16.msra.mxu0 0
    %1236 = vmatprep.subr.bf16.mxu0 0
    %1237 = vmatpush1.bf16.msra.mxu0 0
    %1238 = vmatprep.subr.bf16.mxu0 0
    %1239 = vmatpush1.bf16.msra.mxu0 0
    %1240 = vmatprep.subr.bf16.mxu0 0
    %1241 = vmatpush1.bf16.msra.mxu0 0
    %1242 = vmatprep.subr.bf16.mxu0 0
    %1243 = vmatpush1.bf16.msra.mxu0 0
    %1244 = vmatprep.subr.bf16.mxu0 0
    %1245 = vmatpush1.bf16.msra.mxu0 0
    %1246 = vmatprep.mubr.bf16.mxu0 0
    %1247 = vmatmul.mubr.bf16.gmra.mrb[0].mxu0 %v1105
    %v1248 = vpop.f32.mrb[0].mxu0
    %v1249 = vadd.f32 %v1127, %v1248
    %v1250 = vpop.f32.mrb[0].mxu0
    %v1251 = vadd.f32 %v1131, %v1250
    %v1252 = vpop.f32.mrb[0].mxu0
    %v1253 = vadd.f32 %v1127, %v1252
    %v1254 = vpop.f32.mrb[0].mxu0
    %v1255 = vadd.f32 %v1131, %v1254
    %1256 = vdwg.mxu0
    %v1257 = vmul.f32 %v1249, 0.01
    %v1258 = vmul.f32 %v1251, 0.01
    %v1259 = vmul.f32 %v1253, 0.01
    %v1260 = vmul.f32 %v1255, 0.01
    %v1261 = vmax.f32 %v1249, %v1257
    %v1262 = vmax.f32 %v1251, %v1258
    %v1263 = vmax.f32 %v1253, %v1259
    %v1264 = vmax.f32 %v1255, %v1260
    %v1265 = vpack.c.bf16 %v1263, %v1261
    %v1266 = vpack.c.bf16 %v1264, %v1262
    %v1267 = vld [vmem:[#allocation14] sm:$0xff]
    %v1268 = vld [vmem:[#allocation14 + $0x8] sm:$0xff]
    %v1269 = vld [vmem:[#allocation14 + $0x10] sm:$0xff]
    %v1270 = vld [vmem:[#allocation14 + $0x18] sm:$0xff]
    %v1271 = vld [vmem:[#allocation14 + $0x20] sm:$0xff]
    %v1272 = vld [vmem:[#allocation14 + $0x28] sm:$0xff]
    %v1273 = vld [vmem:[#allocation14 + $0x30] sm:$0xff]
    %v1274 = vld [vmem:[#allocation14 + $0x38] sm:$0xff]
    %v1275 = vld [vmem:[#allocation14 + $0x40] sm:$0xff]
    %v1276 = vld [vmem:[#allocation14 + $0x48] sm:$0xff]
    %v1277 = vld [vmem:[#allocation14 + $0x50] sm:$0xff]
    %v1278 = vld [vmem:[#allocation14 + $0x58] sm:$0xff]
    %v1279 = vld [vmem:[#allocation14 + $0x60] sm:$0xff]
    %v1280 = vld [vmem:[#allocation14 + $0x68] sm:$0xff]
    %v1281 = vld [vmem:[#allocation14 + $0x70] sm:$0xff]
    %v1282 = vld [vmem:[#allocation14 + $0x78] sm:$0xff]
    %v1283 = vld [vmem:[#allocation14 + $0x80] sm:$0xff]
    %v1284 = vld [vmem:[#allocation14 + $0x88] sm:$0xff]
    %v1285 = vld [vmem:[#allocation14 + $0x90] sm:$0xff]
    %v1286 = vld [vmem:[#allocation14 + $0x98] sm:$0xff]
    %v1287 = vld [vmem:[#allocation14 + $0xa0] sm:$0xff]
    %v1288 = vld [vmem:[#allocation14 + $0xa8] sm:$0xff]
    %v1289 = vld [vmem:[#allocation14 + $0xb0] sm:$0xff]
    %v1290 = vld [vmem:[#allocation14 + $0xb8] sm:$0xff]
    %v1291 = vld [vmem:[#allocation14 + $0xc0] sm:$0xff]
    %v1292 = vld [vmem:[#allocation14 + $0xc8] sm:$0xff]
    %v1293 = vld [vmem:[#allocation14 + $0xd0] sm:$0xff]
    %v1294 = vld [vmem:[#allocation14 + $0xd8] sm:$0xff]
    %v1295 = vld [vmem:[#allocation14 + $0xe0] sm:$0xff]
    %v1296 = vld [vmem:[#allocation14 + $0xe8] sm:$0xff]
    %v1297 = vld [vmem:[#allocation14 + $0xf0] sm:$0xff]
    %v1298 = vld [vmem:[#allocation14 + $0xf8] sm:$0xff]
    %v1299 = vld [vmem:[%s13] sm:$0x3]
    %v1301 = vlaneseq
    %v1302 = vshrl.u32 %v1301, 7
    %v1303 = vsub.s32 0, %v1302
    %v1304 = vrot.slane %v1299, %v1303
    %v1305 = vlaneseq
    %v1306 = vshrl.u32 %v1305, 7
    %v1307 = vsub.s32 1, %v1306
    %v1308 = vrot.slane %v1299, %v1307
    %v1343 = vunpack.c.l.b16 %v1267
    %v1344 = vunpack.c.h.b16 %v1267
    %v1345 = vunpack.c.l.b16 %v1268
    %v1346 = vunpack.c.h.b16 %v1268
    %v1347 = vunpack.c.l.b16 %v1269
    %v1348 = vunpack.c.h.b16 %v1269
    %v1349 = vunpack.c.l.b16 %v1270
    %v1350 = vunpack.c.h.b16 %v1270
    %v1351 = vunpack.c.l.b16 %v1271
    %v1352 = vunpack.c.h.b16 %v1271
    %v1353 = vunpack.c.l.b16 %v1272
    %v1354 = vunpack.c.h.b16 %v1272
    %v1355 = vunpack.c.l.b16 %v1273
    %v1356 = vunpack.c.h.b16 %v1273
    %v1357 = vunpack.c.l.b16 %v1274
    %v1358 = vunpack.c.h.b16 %v1274
    %v1359 = vunpack.c.l.b16 %v1275
    %v1360 = vunpack.c.h.b16 %v1275
    %v1361 = vunpack.c.l.b16 %v1276
    %v1362 = vunpack.c.h.b16 %v1276
    %v1363 = vunpack.c.l.b16 %v1277
    %v1364 = vunpack.c.h.b16 %v1277
    %v1365 = vunpack.c.l.b16 %v1278
    %v1366 = vunpack.c.h.b16 %v1278
    %v1367 = vunpack.c.l.b16 %v1279
    %v1368 = vunpack.c.h.b16 %v1279
    %v1369 = vunpack.c.l.b16 %v1280
    %v1370 = vunpack.c.h.b16 %v1280
    %v1371 = vunpack.c.l.b16 %v1281
    %v1372 = vunpack.c.h.b16 %v1281
    %v1373 = vunpack.c.l.b16 %v1282
    %v1374 = vunpack.c.h.b16 %v1282
    %v1375 = vunpack.c.l.b16 %v1283
    %v1376 = vunpack.c.h.b16 %v1283
    %v1377 = vunpack.c.l.b16 %v1284
    %v1378 = vunpack.c.h.b16 %v1284
    %v1379 = vunpack.c.l.b16 %v1285
    %v1380 = vunpack.c.h.b16 %v1285
    %v1381 = vunpack.c.l.b16 %v1286
    %v1382 = vunpack.c.h.b16 %v1286
    %v1383 = vunpack.c.l.b16 %v1287
    %v1384 = vunpack.c.h.b16 %v1287
    %v1385 = vunpack.c.l.b16 %v1288
    %v1386 = vunpack.c.h.b16 %v1288
    %v1387 = vunpack.c.l.b16 %v1289
    %v1388 = vunpack.c.h.b16 %v1289
    %v1389 = vunpack.c.l.b16 %v1290
    %v1390 = vunpack.c.h.b16 %v1290
    %v1391 = vunpack.c.l.b16 %v1291
    %v1392 = vunpack.c.h.b16 %v1291
    %v1393 = vunpack.c.l.b16 %v1292
    %v1394 = vunpack.c.h.b16 %v1292
    %v1395 = vunpack.c.l.b16 %v1293
    %v1396 = vunpack.c.h.b16 %v1293
    %v1397 = vunpack.c.l.b16 %v1294
    %v1398 = vunpack.c.h.b16 %v1294
    %v1399 = vunpack.c.l.b16 %v1295
    %v1400 = vunpack.c.h.b16 %v1295
    %v1401 = vunpack.c.l.b16 %v1296
    %v1402 = vunpack.c.h.b16 %v1296
    %v1403 = vunpack.c.l.b16 %v1297
    %v1404 = vunpack.c.h.b16 %v1297
    %v1405 = vunpack.c.l.b16 %v1298
    %v1406 = vunpack.c.h.b16 %v1298
    %v1407 = vpack.c.b16 %v1345, %v1343
    %v1408 = vpack.c.b16 %v1346, %v1344
    %v1409 = vpack.c.b16 %v1349, %v1347
    %v1410 = vpack.c.b16 %v1350, %v1348
    %v1411 = vpack.c.b16 %v1353, %v1351
    %v1412 = vpack.c.b16 %v1354, %v1352
    %v1413 = vpack.c.b16 %v1357, %v1355
    %v1414 = vpack.c.b16 %v1358, %v1356
    %v1415 = vpack.c.b16 %v1361, %v1359
    %v1416 = vpack.c.b16 %v1362, %v1360
    %v1417 = vpack.c.b16 %v1365, %v1363
    %v1418 = vpack.c.b16 %v1366, %v1364
    %v1419 = vpack.c.b16 %v1369, %v1367
    %v1420 = vpack.c.b16 %v1370, %v1368
    %v1421 = vpack.c.b16 %v1373, %v1371
    %v1422 = vpack.c.b16 %v1374, %v1372
    %v1423 = vpack.c.b16 %v1377, %v1375
    %v1424 = vpack.c.b16 %v1378, %v1376
    %v1425 = vpack.c.b16 %v1381, %v1379
    %v1426 = vpack.c.b16 %v1382, %v1380
    %v1427 = vpack.c.b16 %v1385, %v1383
    %v1428 = vpack.c.b16 %v1386, %v1384
    %v1429 = vpack.c.b16 %v1389, %v1387
    %v1430 = vpack.c.b16 %v1390, %v1388
    %v1431 = vpack.c.b16 %v1393, %v1391
    %v1432 = vpack.c.b16 %v1394, %v1392
    %v1433 = vpack.c.b16 %v1397, %v1395
    %v1434 = vpack.c.b16 %v1398, %v1396
    %v1435 = vpack.c.b16 %v1401, %v1399
    %v1436 = vpack.c.b16 %v1402, %v1400
    %v1437 = vpack.c.b16 %v1405, %v1403
    %v1438 = vpack.c.b16 %v1406, %v1404
    %1471 = vmatprep.subr.bf16.mxu0 %v1408
    %1472 = vmatpush1.bf16.msra.mxu0 %v1407
    %1473 = vmatprep.subr.bf16.mxu0 %v1410
    %1474 = vmatpush1.bf16.msra.mxu0 %v1409
    %1475 = vmatprep.subr.bf16.mxu0 %v1412
    %1476 = vmatpush1.bf16.msra.mxu0 %v1411
    %1477 = vmatprep.subr.bf16.mxu0 %v1414
    %1478 = vmatpush1.bf16.msra.mxu0 %v1413
    %1479 = vmatprep.subr.bf16.mxu0 %v1416
    %1480 = vmatpush1.bf16.msra.mxu0 %v1415
    %1481 = vmatprep.subr.bf16.mxu0 %v1418
    %1482 = vmatpush1.bf16.msra.mxu0 %v1417
    %1483 = vmatprep.subr.bf16.mxu0 %v1420
    %1484 = vmatpush1.bf16.msra.mxu0 %v1419
    %1485 = vmatprep.subr.bf16.mxu0 %v1422
    %1486 = vmatpush1.bf16.msra.mxu0 %v1421
    %1487 = vmatprep.subr.bf16.mxu0 %v1424
    %1488 = vmatpush1.bf16.msra.mxu0 %v1423
    %1489 = vmatprep.subr.bf16.mxu0 %v1426
    %1490 = vmatpush1.bf16.msra.mxu0 %v1425
    %1491 = vmatprep.subr.bf16.mxu0 %v1428
    %1492 = vmatpush1.bf16.msra.mxu0 %v1427
    %1493 = vmatprep.subr.bf16.mxu0 %v1430
    %1494 = vmatpush1.bf16.msra.mxu0 %v1429
    %1495 = vmatprep.subr.bf16.mxu0 %v1432
    %1496 = vmatpush1.bf16.msra.mxu0 %v1431
    %1497 = vmatprep.subr.bf16.mxu0 %v1434
    %1498 = vmatpush1.bf16.msra.mxu0 %v1433
    %1499 = vmatprep.subr.bf16.mxu0 %v1436
    %1500 = vmatpush1.bf16.msra.mxu0 %v1435
    %1501 = vmatprep.subr.bf16.mxu0 %v1438
    %1502 = vmatpush1.bf16.msra.mxu0 %v1437
    %1503 = vmatprep.mubr.bf16.mxu0 %v1266
    %1504 = vmatmul.mubr.bf16.gmra.mrb[0].mxu0 %v1265
    %v1505 = vpop.f32.mrb[0].mxu0
    %v1506 = vadd.f32 %v1304, %v1505
    %v1507 = vpop.f32.mrb[0].mxu0
    %v1508 = vadd.f32 %v1308, %v1507
    %v1509 = vpop.f32.mrb[0].mxu0
    %v1510 = vadd.f32 %v1304, %v1509
    %v1511 = vpop.f32.mrb[0].mxu0
    %v1512 = vadd.f32 %v1308, %v1511
    %1513 = vdwg.mxu0
    %v1514 = vmul.f32 %v1506, 0.01
    %v1515 = vmul.f32 %v1508, 0.01
    %v1516 = vmul.f32 %v1510, 0.01
    %v1517 = vmul.f32 %v1512, 0.01
    %v1518 = vmax.f32 %v1506, %v1514
    %v1519 = vmax.f32 %v1508, %v1515
    %v1520 = vmax.f32 %v1510, %v1516
    %v1521 = vmax.f32 %v1512, %v1517
    %v1522 = vpack.c.bf16 %v1520, %v1518
    %v1523 = vpack.c.bf16 %v1521, %v1519
    %v1524 = vld [vmem:[#allocation16] sm:$0xff]
    %v1525 = vld [vmem:[#allocation16 + $0x8] sm:$0xff]
    %v1526 = vld [vmem:[#allocation16 + $0x10] sm:$0xff]
    %v1527 = vld [vmem:[#allocation16 + $0x18] sm:$0xff]
    %v1528 = vld [vmem:[#allocation16 + $0x20] sm:$0xff]
    %v1529 = vld [vmem:[#allocation16 + $0x28] sm:$0xff]
    %v1530 = vld [vmem:[#allocation16 + $0x30] sm:$0xff]
    %v1531 = vld [vmem:[#allocation16 + $0x38] sm:$0xff]
    %v1532 = vld [vmem:[#allocation16 + $0x40] sm:$0xff]
    %v1533 = vld [vmem:[#allocation16 + $0x48] sm:$0xff]
    %v1534 = vld [vmem:[#allocation16 + $0x50] sm:$0xff]
    %v1535 = vld [vmem:[#allocation16 + $0x58] sm:$0xff]
    %v1536 = vld [vmem:[#allocation16 + $0x60] sm:$0xff]
    %v1537 = vld [vmem:[#allocation16 + $0x68] sm:$0xff]
    %v1538 = vld [vmem:[#allocation16 + $0x70] sm:$0xff]
    %v1539 = vld [vmem:[#allocation16 + $0x78] sm:$0xff]
    %v1540 = vld [vmem:[#allocation16 + $0x80] sm:$0xff]
    %v1541 = vld [vmem:[#allocation16 + $0x88] sm:$0xff]
    %v1542 = vld [vmem:[#allocation16 + $0x90] sm:$0xff]
    %v1543 = vld [vmem:[#allocation16 + $0x98] sm:$0xff]
    %v1544 = vld [vmem:[#allocation16 + $0xa0] sm:$0xff]
    %v1545 = vld [vmem:[#allocation16 + $0xa8] sm:$0xff]
    %v1546 = vld [vmem:[#allocation16 + $0xb0] sm:$0xff]
    %v1547 = vld [vmem:[#allocation16 + $0xb8] sm:$0xff]
    %v1548 = vld [vmem:[#allocation16 + $0xc0] sm:$0xff]
    %v1549 = vld [vmem:[#allocation16 + $0xc8] sm:$0xff]
    %v1550 = vld [vmem:[#allocation16 + $0xd0] sm:$0xff]
    %v1551 = vld [vmem:[#allocation16 + $0xd8] sm:$0xff]
    %v1552 = vld [vmem:[#allocation16 + $0xe0] sm:$0xff]
    %v1553 = vld [vmem:[#allocation16 + $0xe8] sm:$0xff]
    %v1554 = vld [vmem:[#allocation16 + $0xf0] sm:$0xff]
    %v1555 = vld [vmem:[#allocation16 + $0xf8] sm:$0xff]
    %v1556 = vld [vmem:[%s15] sm:$0x3]
    %v1558 = vlaneseq
    %v1559 = vshrl.u32 %v1558, 7
    %v1560 = vsub.s32 0, %v1559
    %v1561 = vrot.slane %v1556, %v1560
    %v1562 = vlaneseq
    %v1563 = vshrl.u32 %v1562, 7
    %v1564 = vsub.s32 1, %v1563
    %v1565 = vrot.slane %v1556, %v1564
    %v1600 = vunpack.c.l.b16 %v1524
    %v1601 = vunpack.c.h.b16 %v1524
    %v1602 = vunpack.c.l.b16 %v1525
    %v1603 = vunpack.c.h.b16 %v1525
    %v1604 = vunpack.c.l.b16 %v1526
    %v1605 = vunpack.c.h.b16 %v1526
    %v1606 = vunpack.c.l.b16 %v1527
    %v1607 = vunpack.c.h.b16 %v1527
    %v1608 = vunpack.c.l.b16 %v1528
    %v1609 = vunpack.c.h.b16 %v1528
    %v1610 = vunpack.c.l.b16 %v1529
    %v1611 = vunpack.c.h.b16 %v1529
    %v1612 = vunpack.c.l.b16 %v1530
    %v1613 = vunpack.c.h.b16 %v1530
    %v1614 = vunpack.c.l.b16 %v1531
    %v1615 = vunpack.c.h.b16 %v1531
    %v1616 = vunpack.c.l.b16 %v1532
    %v1617 = vunpack.c.h.b16 %v1532
    %v1618 = vunpack.c.l.b16 %v1533
    %v1619 = vunpack.c.h.b16 %v1533
    %v1620 = vunpack.c.l.b16 %v1534
    %v1621 = vunpack.c.h.b16 %v1534
    %v1622 = vunpack.c.l.b16 %v1535
    %v1623 = vunpack.c.h.b16 %v1535
    %v1624 = vunpack.c.l.b16 %v1536
    %v1625 = vunpack.c.h.b16 %v1536
    %v1626 = vunpack.c.l.b16 %v1537
    %v1627 = vunpack.c.h.b16 %v1537
    %v1628 = vunpack.c.l.b16 %v1538
    %v1629 = vunpack.c.h.b16 %v1538
    %v1630 = vunpack.c.l.b16 %v1539
    %v1631 = vunpack.c.h.b16 %v1539
    %v1632 = vunpack.c.l.b16 %v1540
    %v1633 = vunpack.c.h.b16 %v1540
    %v1634 = vunpack.c.l.b16 %v1541
    %v1635 = vunpack.c.h.b16 %v1541
    %v1636 = vunpack.c.l.b16 %v1542
    %v1637 = vunpack.c.h.b16 %v1542
    %v1638 = vunpack.c.l.b16 %v1543
    %v1639 = vunpack.c.h.b16 %v1543
    %v1640 = vunpack.c.l.b16 %v1544
    %v1641 = vunpack.c.h.b16 %v1544
    %v1642 = vunpack.c.l.b16 %v1545
    %v1643 = vunpack.c.h.b16 %v1545
    %v1644 = vunpack.c.l.b16 %v1546
    %v1645 = vunpack.c.h.b16 %v1546
    %v1646 = vunpack.c.l.b16 %v1547
    %v1647 = vunpack.c.h.b16 %v1547
    %v1648 = vunpack.c.l.b16 %v1548
    %v1649 = vunpack.c.h.b16 %v1548
    %v1650 = vunpack.c.l.b16 %v1549
    %v1651 = vunpack.c.h.b16 %v1549
    %v1652 = vunpack.c.l.b16 %v1550
    %v1653 = vunpack.c.h.b16 %v1550
    %v1654 = vunpack.c.l.b16 %v1551
    %v1655 = vunpack.c.h.b16 %v1551
    %v1656 = vunpack.c.l.b16 %v1552
    %v1657 = vunpack.c.h.b16 %v1552
    %v1658 = vunpack.c.l.b16 %v1553
    %v1659 = vunpack.c.h.b16 %v1553
    %v1660 = vunpack.c.l.b16 %v1554
    %v1661 = vunpack.c.h.b16 %v1554
    %v1662 = vunpack.c.l.b16 %v1555
    %v1663 = vunpack.c.h.b16 %v1555
    %v1664 = vpack.c.b16 %v1602, %v1600
    %v1665 = vpack.c.b16 %v1603, %v1601
    %v1666 = vpack.c.b16 %v1606, %v1604
    %v1667 = vpack.c.b16 %v1607, %v1605
    %v1668 = vpack.c.b16 %v1610, %v1608
    %v1669 = vpack.c.b16 %v1611, %v1609
    %v1670 = vpack.c.b16 %v1614, %v1612
    %v1671 = vpack.c.b16 %v1615, %v1613
    %v1672 = vpack.c.b16 %v1618, %v1616
    %v1673 = vpack.c.b16 %v1619, %v1617
    %v1674 = vpack.c.b16 %v1622, %v1620
    %v1675 = vpack.c.b16 %v1623, %v1621
    %v1676 = vpack.c.b16 %v1626, %v1624
    %v1677 = vpack.c.b16 %v1627, %v1625
    %v1678 = vpack.c.b16 %v1630, %v1628
    %v1679 = vpack.c.b16 %v1631, %v1629
    %v1680 = vpack.c.b16 %v1634, %v1632
    %v1681 = vpack.c.b16 %v1635, %v1633
    %v1682 = vpack.c.b16 %v1638, %v1636
    %v1683 = vpack.c.b16 %v1639, %v1637
    %v1684 = vpack.c.b16 %v1642, %v1640
    %v1685 = vpack.c.b16 %v1643, %v1641
    %v1686 = vpack.c.b16 %v1646, %v1644
    %v1687 = vpack.c.b16 %v1647, %v1645
    %v1688 = vpack.c.b16 %v1650, %v1648
    %v1689 = vpack.c.b16 %v1651, %v1649
    %v1690 = vpack.c.b16 %v1654, %v1652
    %v1691 = vpack.c.b16 %v1655, %v1653
    %v1692 = vpack.c.b16 %v1658, %v1656
    %v1693 = vpack.c.b16 %v1659, %v1657
    %v1694 = vpack.c.b16 %v1662, %v1660
    %v1695 = vpack.c.b16 %v1663, %v1661
    %1728 = vmatprep.subr.bf16.mxu0 %v1665
    %1729 = vmatpush1.bf16.msra.mxu0 %v1664
    %1730 = vmatprep.subr.bf16.mxu0 %v1667
    %1731 = vmatpush1.bf16.msra.mxu0 %v1666
    %1732 = vmatprep.subr.bf16.mxu0 %v1669
    %1733 = vmatpush1.bf16.msra.mxu0 %v1668
    %1734 = vmatprep.subr.bf16.mxu0 %v1671
    %1735 = vmatpush1.bf16.msra.mxu0 %v1670
    %1736 = vmatprep.subr.bf16.mxu0 %v1673
    %1737 = vmatpush1.bf16.msra.mxu0 %v1672
    %1738 = vmatprep.subr.bf16.mxu0 %v1675
    %1739 = vmatpush1.bf16.msra.mxu0 %v1674
    %1740 = vmatprep.subr.bf16.mxu0 %v1677
    %1741 = vmatpush1.bf16.msra.mxu0 %v1676
    %1742 = vmatprep.subr.bf16.mxu0 %v1679
    %1743 = vmatpush1.bf16.msra.mxu0 %v1678
    %1744 = vmatprep.subr.bf16.mxu0 %v1681
    %1745 = vmatpush1.bf16.msra.mxu0 %v1680
    %1746 = vmatprep.subr.bf16.mxu0 %v1683
    %1747 = vmatpush1.bf16.msra.mxu0 %v1682
    %1748 = vmatprep.subr.bf16.mxu0 %v1685
    %1749 = vmatpush1.bf16.msra.mxu0 %v1684
    %1750 = vmatprep.subr.bf16.mxu0 %v1687
    %1751 = vmatpush1.bf16.msra.mxu0 %v1686
    %1752 = vmatprep.subr.bf16.mxu0 %v1689
    %1753 = vmatpush1.bf16.msra.mxu0 %v1688
    %1754 = vmatprep.subr.bf16.mxu0 %v1691
    %1755 = vmatpush1.bf16.msra.mxu0 %v1690
    %1756 = vmatprep.subr.bf16.mxu0 %v1693
    %1757 = vmatpush1.bf16.msra.mxu0 %v1692
    %1758 = vmatprep.subr.bf16.mxu0 %v1695
    %1759 = vmatpush1.bf16.msra.mxu0 %v1694
    %1760 = vmatprep.mubr.bf16.mxu0 %v1523
    %1761 = vmatmul.mubr.bf16.gmra.mrb[0].mxu0 %v1522
    %v1762 = vpop.f32.mrb[0].mxu0
    %v1763 = vadd.f32 %v1561, %v1762
    %v1764 = vpop.f32.mrb[0].mxu0
    %v1765 = vadd.f32 %v1565, %v1764
    %v1766 = vpop.f32.mrb[0].mxu0
    %v1767 = vadd.f32 %v1561, %v1766
    %v1768 = vpop.f32.mrb[0].mxu0
    %v1769 = vadd.f32 %v1565, %v1768
    %1770 = vdwg.mxu0
    %1771 = vst [vmem:[#allocation21] sm:$0xff] %v1763
    %1772 = vst [vmem:[#allocation21 + $0x8] sm:$0xff] %v1765
    %1773 = vst [vmem:[#allocation21 + $0x10] sm:$0xff] %v1767
    %1774 = vst [vmem:[#allocation21 + $0x18] sm:$0xff] %v1769
    %v1775 = vsub.f32 %v189, %v1763
    %v1776 = vsub.f32 %v190, %v1765
    %v1777 = vsub.f32 %v191, %v1767
    %v1778 = vsub.f32 %v192, %v1769
    %v1779 = vmul.f32 %v1775, %v1775
    %v1780 = vmul.f32 %v1776, %v1776
    %v1781 = vmul.f32 %v1777, %v1777
    %v1782 = vmul.f32 %v1778, %v1778
    %v1783 = vld [vmem:[%s16] sm:$0x3]
    %v1785 = vlaneseq
    %v1786 = vshrl.u32 %v1785, 7
    %v1787 = vsub.s32 0, %v1786
    %v1788 = vrot.slane %v1783, %v1787
    %v1789 = vlaneseq
    %v1790 = vshrl.u32 %v1789, 7
    %v1791 = vsub.s32 1, %v1790
    %v1792 = vrot.slane %v1783, %v1791
    %v1795 = vmul.f32 %v1779, %v1788
    %v1796 = vmul.f32 %v1780, %v1792
    %v1797 = vmul.f32 %v1781, %v1788
    %v1798 = vmul.f32 %v1782, %v1792
    %v1799 = vadd.f32 %v1795, %v1796
    %v1800 = vadd.f32 %v1799, %v1797
    %v1801 = vadd.f32 %v1800, %v1798
    %1802 = vadd.xlane.f32.xlu0 %v1801
    %v1803 = vpop.xlane.xlu0 %1802
    %v1804 = vrot.slane %v1803, 4
    %v1805 = vadd.f32 %v1803, %v1804
    %v1806 = vrot.slane %v1805, 2
    %v1807 = vadd.f32 %v1805, %v1806
    %v1808 = vrot.slane %v1807, 1
    %v1809 = vadd.f32 %v1807, %v1808
    %s1810 = vtos %v1809
    %v1811 = vstv %s1810
    %1812 = vst [vmem:[#allocation24] sm:$0xff] %v1811
    // Predicated region
    $region106: #{tpu_custom_call.1} parent=1 // pred_check
      _
    $region107: #{tpu_custom_call.1} parent=1 // pred_check_branch
      %1814 = sbr.rel (0) target = $region109
    $region108: #{tpu_custom_call.1} parent=1 // pred_region
      %s1816 = ssub.s32 256, 256
      %1817 = vsyncadd [#allocation4], %s1816
      %s1818 = sshll.u32 [#allocation17], 4
      %s1819 = int_to_ptr.vmem [resolvable:$true] %s1818
      %1824 = dma.vmem_to_hbm [thread:$0]  %s1819, 256, %s17, [#allocation4], 128, 128, 8
    $region109: #{tpu_custom_call.1} parent=1 // pred_fallthru
      _
    // Predicated region
    $region110: #{tpu_custom_call.1} parent=1 // pred_check
      _
    $region111: #{tpu_custom_call.1} parent=1 // pred_check_branch
      %1826 = sbr.rel (0) target = $region113
    $region112: #{tpu_custom_call.1} parent=1 // pred_region
      %s1828 = ssub.s32 256, 256
      %1829 = vsyncadd [#allocation19], %s1828
      %s1830 = sshll.u32 [#allocation18], 4
      %s1831 = int_to_ptr.vmem [resolvable:$true] %s1830
      %1836 = dma.vmem_to_hbm [thread:$0]  %s1831, 256, %s18, [#allocation19], 128, 128, 8
    $region113: #{tpu_custom_call.1} parent=1 // pred_fallthru
      _
    // Predicated region
    $region114: #{tpu_custom_call.1} parent=1 // pred_check
      _
    $region115: #{tpu_custom_call.1} parent=1 // pred_check_branch
      %1838 = sbr.rel (0) target = $region117
    $region116: #{tpu_custom_call.1} parent=1 // pred_region
      %s1840 = ssub.s32 256, 256
      %1841 = vsyncadd [#allocation19], %s1840
      %s1842 = sshll.u32 [#allocation20], 4
      %s1843 = int_to_ptr.vmem [resolvable:$true] %s1842
      %1848 = dma.vmem_to_hbm [thread:$0]  %s1843, 256, %s19, [#allocation19], 128, 128, 8
    $region117: #{tpu_custom_call.1} parent=1 // pred_fallthru
      _
    // Predicated region
    $region118: #{tpu_custom_call.1} parent=1 // pred_check
      _
    $region119: #{tpu_custom_call.1} parent=1 // pred_check_branch
      %1850 = sbr.rel (0) target = $region121
    $region120: #{tpu_custom_call.1} parent=1 // pred_region
      %s1852 = ssub.s32 512, 512
      %1853 = vsyncadd [#allocation22], %s1852
      %s1854 = sshll.u32 [#allocation21], 4
      %s1855 = int_to_ptr.vmem [resolvable:$true] %s1854
      %1860 = dma.vmem_to_hbm [thread:$0]  %s1855, 512, %s20, [#allocation22], 256, 256, 16
    $region121: #{tpu_custom_call.1} parent=1 // pred_fallthru
      _
    // Predicated region
    $region122: #{tpu_custom_call.1} parent=1 // pred_check
      _
    $region123: #{tpu_custom_call.1} parent=1 // pred_check_branch
      %1862 = sbr.rel (0) target = $region125
    $region124: #{tpu_custom_call.1} parent=1 // pred_region
      %s1864 = ssub.s32 128, 128
      %1865 = vsyncadd [#allocation22], %s1864
      %s1867 = sshll.u32 [#allocation23], 4
      %s1868 = int_to_ptr.vmem [resolvable:$true] %s1867
      %1870 = dma.vmem_to_hbm [thread:$0]  %s1868, 128, %s21, [#allocation22]
    $region125: #{tpu_custom_call.1} parent=1 // pred_fallthru
      _
    // Predicated region
    $region126: #{tpu_custom_call.1} parent=1 // pred_check
      _
    $region127: #{tpu_custom_call.1} parent=1 // pred_check_branch
      %1872 = sbr.rel (0) target = $region129
    $region128: #{tpu_custom_call.1} parent=1 // pred_region
      %s1874 = ssub.s32 128, 128
      %1875 = vsyncadd [#allocation25], %s1874
      %s1877 = sshll.u32 [#allocation24], 4
      %s1878 = int_to_ptr.vmem [resolvable:$true] %s1877
      %1880 = dma.vmem_to_hbm [thread:$0]  %s1878, 128, %s22, [#allocation25]
    $region129: #{tpu_custom_call.1} parent=1 // pred_fallthru
      _
    // Predicated region
    $region130: #{tpu_custom_call.1} parent=1 // pred_check
      _
    $region131: #{tpu_custom_call.1} parent=1 // pred_check_branch
      %1882 = sbr.rel (0) target = $region133
    $region132: #{tpu_custom_call.1} parent=1 // pred_region
      %1883 = dma.done [#allocation4], 256
    $region133: #{tpu_custom_call.1} parent=1 // pred_fallthru
      _
    // Predicated region
    $region134: #{tpu_custom_call.1} parent=1 // pred_check
      _
    $region135: #{tpu_custom_call.1} parent=1 // pred_check_branch
      %1885 = sbr.rel (0) target = $region137
    $region136: #{tpu_custom_call.1} parent=1 // pred_region
      %1886 = dma.done [#allocation19], 256
    $region137: #{tpu_custom_call.1} parent=1 // pred_fallthru
      _
    // Predicated region
    $region138: #{tpu_custom_call.1} parent=1 // pred_check
      _
    $region139: #{tpu_custom_call.1} parent=1 // pred_check_branch
      %1888 = sbr.rel (0) target = $region141
    $region140: #{tpu_custom_call.1} parent=1 // pred_region
      %1889 = dma.done [#allocation19], 256
    $region141: #{tpu_custom_call.1} parent=1 // pred_fallthru
      _
    // Predicated region
    $region142: #{tpu_custom_call.1} parent=1 // pred_check
      _
    $region143: #{tpu_custom_call.1} parent=1 // pred_check_branch
      %1891 = sbr.rel (0) target = $region145
    $region144: #{tpu_custom_call.1} parent=1 // pred_region
      %1892 = dma.done [#allocation22], 512
    $region145: #{tpu_custom_call.1} parent=1 // pred_fallthru
      _
    // Predicated region
    $region146: #{tpu_custom_call.1} parent=1 // pred_check
      _
    $region147: #{tpu_custom_call.1} parent=1 // pred_check_branch
      %1894 = sbr.rel (0) target = $region149
    $region148: #{tpu_custom_call.1} parent=1 // pred_region
      %1895 = dma.done [#allocation22], 128
    $region149: #{tpu_custom_call.1} parent=1 // pred_fallthru
      _
    // Predicated region
    $region150: #{tpu_custom_call.1} parent=1 // pred_check
      _
    $region151: #{tpu_custom_call.1} parent=1 // pred_check_branch
      %1897 = sbr.rel (0) target = $region153
    $region152: #{tpu_custom_call.1} parent=1 // pred_region
      %1898 = dma.done [#allocation25], 128
    $region153: #{tpu_custom_call.1} parent=1 // pred_fallthru
      _
    %1899 = vsyncpa [#allocation3], 1
    %1900 = vsyncpa [#allocation6], 1
    %1901 = vsyncpa [#allocation9], 1
    %1902 = vsyncpa [#allocation12], 1
    %1903 = vsyncpa [#allocation15], 1
    %1904 = vsyncpa [#allocation4], 1
    %1905 = vsyncpa [#allocation19], 1
    %1906 = vsyncpa [#allocation22], 1
    %1907 = vsyncpa [#allocation25], 1

</llo_original>
